<compile_context>
chip_gen: v7x
topology: tpu7x:2x2x1
jax: 0.10.0
libtpu: 0.0.40
codegen_flags: <defaults>
</compile_context>

<pallas_src>
import jax
import jax.numpy as jnp
from jax.experimental import pallas as pl
from jax.experimental.pallas import tpu as pltpu


def _title_rnn_kernel(x_ref,        # (T, TB, Dp)  time-major input tile, bf16
                      wih_ref,      # (Dp, 2H)     [W_ih_fwd | W_ih_bwd]^T, bf16
                      whh_ref,      # (H, H)       forward W_hh^T, bf16
                      bih_ref,      # (1, 2H)      [b_fwd | b_bwd], f32
                      w1f_ref,      # (H, 128)     fc1 weight^T, forward half, bf16
                      w1b_ref,      # (H, 128)     fc1 weight^T, backward half, bf16
                      b1_ref,       # (1, 128)     f32
                      w2_ref,       # (128, Cp)    fc2 weight^T (lane-padded), bf16
                      b2_ref,       # (1, Cp)      f32
                      out_ref,      # (TB, Cp)     f32
                      pre_ref):     # (T*TB, H)    VMEM scratch, f32
    T, TB, D = x_ref.shape
    H = whh_ref.shape[0]

    # ---- hoisted input projection: ONE GEMM (M = T*TB) covering both directions
    # and every timestep; bias added once (not per step).
    x_flat = x_ref[...].reshape(T * TB, D)                       # bf16
    pre_all = (jnp.dot(x_flat, wih_ref[...], preferred_element_type=jnp.float32)
               + bih_ref[...])                                   # (T*TB, 2H) f32

    # Stage forward pre-acts in VMEM so the unrolled time loop re-loads small
    # (cb, H) slices instead of keeping ~32 f32 vregs of GEMM result live.
    pre_ref[...] = pre_all[:, :H]

    # Backward direction: out[:, -1, H:] is the backward RNN's FIRST step from
    # h0 = 0, so W_hh_b drops out and it only sees x[T-1] (projection already in
    # the GEMM above). pre_all is dead after this point.
    h_bwd = jnp.tanh(pre_all[(T - 1) * TB:, H:])                 # (TB, H) f32

    whh = whh_ref[...]                                           # bf16, stays resident

    # ---- forward recurrence, fully unrolled (T static). Up to 4 independent
    # batch chains (>= 8 rows each) so the scheduler can overlap one chain's MXU
    # matmul with another's EUP tanh along the serial T-step critical path.
    n_chains = max(1, min(TB // 8, 4))
    cb = TB // n_chains
    hs = [jnp.zeros((cb, H), jnp.float32) for _ in range(n_chains)]
    for t in range(T):                                           # static unroll
        base = t * TB
        hs = [
            jnp.tanh(pre_ref[base + c * cb:base + (c + 1) * cb, :]
                     + jnp.dot(hs[c].astype(jnp.bfloat16), whh,
                               preferred_element_type=jnp.float32))
            for c in range(n_chains)
        ]

    # ---- per-chain fc1 -> tanh -> fc2 -> tanh epilogue.
    # No sublane concat of the chains and no (TB, 2H) lane-concat (fc1 weight is
    # split); each chain's epilogue can start as soon as its last tanh retires.
    b1 = b1_ref[...]
    b2 = b2_ref[...]
    for c in range(n_chains):
        hb_c = h_bwd[c * cb:(c + 1) * cb, :].astype(jnp.bfloat16)
        z1 = jnp.tanh(
            jnp.dot(hs[c].astype(jnp.bfloat16), w1f_ref[...],
                    preferred_element_type=jnp.float32)
            + jnp.dot(hb_c, w1b_ref[...], preferred_element_type=jnp.float32)
            + b1)
        z2 = jnp.tanh(
            jnp.dot(z1.astype(jnp.bfloat16), w2_ref[...],
                    preferred_element_type=jnp.float32)
            + b2)
        out_ref[c * cb:(c + 1) * cb, :] = z2.astype(out_ref.dtype)


def _rep_spec(shape):
    """BlockSpec for an array fully resident at every grid step."""
    nd = len(shape)
    return pl.BlockSpec(shape, lambda i, _nd=nd: (0,) * _nd)


def title_rnn_forward(x_btd, params, *, block_b=None):
    """x_btd: (B, T, D) batch-first, like the PyTorch module. Returns (B, C) f32."""
    B, T, D = x_btd.shape
    (wih_f, whh_f, b_f, wih_b, b_b, w1, b1, w2, b2) = params
    H = whh_f.shape[0]
    C = w2.shape[1]

    if block_b is None:
        # Single-TC v5e/v6e: collapse the grid (per-step overhead dominates at
        # small batch, and larger M keeps the GEMMs fuller). Only tile the batch
        # when per-core tiles are still large (>= 128 rows), e.g. v7x 2-TC split.
        block_b = B if (B <= 256 or B % 128 != 0) else 128
    assert B % block_b == 0 and block_b % 8 == 0

    Dp = 128 * pl.cdiv(D, 128)   # lane-dense K for the input GEMM
    Cp = 128 * pl.cdiv(C, 128)   # lane-dense output (no masked vst.msk)

    # One-time parameter prep: fuse both directions' input weights/biases, split
    # fc1 into forward/backward halves, zero-pad lane dims, cast MXU operands to
    # bf16 (biases and all accumulation stay f32 — v5e has no bf16 VPU/EUP).
    wih_cat = jnp.concatenate([wih_f, wih_b], axis=1)                         # (D, 2H)
    if Dp != D:
        wih_cat = jnp.pad(wih_cat, ((0, Dp - D), (0, 0)))
    wih_cat = wih_cat.astype(jnp.bfloat16)                                    # (Dp, 2H)
    b_cat = jnp.concatenate([b_f, b_b], axis=1)                               # (1, 2H) f32
    whh_bf = whh_f.astype(jnp.bfloat16)
    w1f = w1[:H, :].astype(jnp.bfloat16)
    w1b = w1[H:, :].astype(jnp.bfloat16)
    w2p, b2p = w2, b2
    if Cp != C:
        w2p = jnp.pad(w2, ((0, 0), (0, Cp - C)))
        b2p = jnp.pad(b2, ((0, 0), (0, Cp - C)))
    w2_bf = w2p.astype(jnp.bfloat16)

    # Time-major, bf16, lane-padded input (half DMA vs f32; padding cols are 0).
    x_tbd = jnp.transpose(x_btd, (1, 0, 2)).astype(jnp.bfloat16)
    if Dp != D:
        x_tbd = jnp.pad(x_tbd, ((0, 0), (0, 0), (0, Dp - D)))

    grid = (B // block_b,)
    out_p = pl.pallas_call(
        _title_rnn_kernel,
        out_shape=jax.ShapeDtypeStruct((B, Cp), jnp.float32),
        grid=grid,
        in_specs=[
            pl.BlockSpec((T, block_b, Dp), lambda i: (0, i, 0)),
            _rep_spec(wih_cat.shape),
            _rep_spec(whh_bf.shape),
            _rep_spec(b_cat.shape),
            _rep_spec(w1f.shape),
            _rep_spec(w1b.shape),
            _rep_spec(b1.shape),
            _rep_spec(w2_bf.shape),
            _rep_spec(b2p.shape),
        ],
        out_specs=pl.BlockSpec((block_b, Cp), lambda i: (i, 0)),
        scratch_shapes=[pltpu.VMEM((T * block_b, H), jnp.float32)],
        compiler_params=pltpu.CompilerParams(
            dimension_semantics=("parallel",)),
    )(x_tbd, wih_cat, whh_bf, b_cat, w1f, w1b, b1, w2_bf, b2p)
    return out_p[:, :C]


def init_params(key, input_size, hidden_size, num_classes):
    """Deterministic synthetic parameters with the same shapes as the PyTorch module."""
    ks = jax.random.split(key, 12)
    s_rnn = 1.0 / jnp.sqrt(hidden_size)
    s_fc1 = 1.0 / jnp.sqrt(2 * hidden_size)
    s_fc2 = 1.0 / jnp.sqrt(128)

    def u(k, shape, s):
        return jax.random.uniform(k, shape, jnp.float32, -s, s)

    # PyTorch nn.RNN stores weight_ih_l0 (H, D) etc.; kept transposed (D, H).
    wih_f = u(ks[0], (input_size, hidden_size), s_rnn)
    whh_f = u(ks[1], (hidden_size, hidden_size), s_rnn)
    b_f = u(ks[2], (1, hidden_size), s_rnn) + u(ks[3], (1, hidden_size), s_rnn)
    wih_b = u(ks[4], (input_size, hidden_size), s_rnn)
    b_b = u(ks[5], (1, hidden_size), s_rnn) + u(ks[6], (1, hidden_size), s_rnn)

    w1 = u(ks[7], (2 * hidden_size, 128), s_fc1)       # fc1: Linear(2H, 128)
    b1 = u(ks[8], (1, 128), s_fc1)
    w2 = u(ks[9], (128, num_classes), s_fc2)           # fc2: Linear(128, C)
    b2 = u(ks[10], (1, num_classes), s_fc2)
    return (wih_f, whh_f, b_f, wih_b, b_b, w1, b1, w2, b2)


def reference_forward_f32(x_btd, params):
    """Pure-JAX f32 reference (PyTorch semantics)."""
    (wih_f, whh_f, b_f, wih_b, b_b, w1, b1, w2, b2) = params
    B, T, D = x_btd.shape
    H = whh_f.shape[0]
    h = jnp.zeros((B, H), jnp.float32)
    for t in range(T):
        h = jnp.tanh(x_btd[:, t, :] @ wih_f + h @ whh_f + b_f)
    h_bwd = jnp.tanh(x_btd[:, -1, :] @ wih_b + b_b)
    feat = jnp.concatenate([h, h_bwd], axis=-1)
    z1 = jnp.tanh(feat @ w1 + b1)
    return jnp.tanh(z1 @ w2 + b2)


def reference_forward_mixed(x_btd, params):
    """Pure-JAX reference mirroring the kernel's bf16-MXU / f32-accumulate precision."""
    (wih_f, whh_f, b_f, wih_b, b_b, w1, b1, w2, b2) = params
    B, T, D = x_btd.shape
    H = whh_f.shape[0]

    def mm(a, b):
        return jnp.dot(a.astype(jnp.bfloat16), b.astype(jnp.bfloat16),
                       preferred_element_type=jnp.float32)

    pre = mm(x_btd.reshape(B * T, D), wih_f).reshape(B, T, H) + b_f
    h = jnp.zeros((B, H), jnp.float32)
    for t in range(T):
        h = jnp.tanh(pre[:, t, :] + mm(h, whh_f))
    h_bwd = jnp.tanh(mm(x_btd[:, -1, :], wih_b) + b_b)
    z1 = jnp.tanh(mm(h, w1[:H]) + mm(h_bwd, w1[H:]) + b1)
    return jnp.tanh(mm(z1, w2) + b2)


if __name__ == "__main__":
    # Small shapes consistent with the module: hidden_size must be 128 (see note),
    # batch = 16 matches the original script's batch_size.
    B, T, D = 16, 8, 64          # batch, seq-len, input_size
    H, C = 128, 30               # hidden_size, num_classes

    key = jax.random.PRNGKey(0)
    kx, kp = jax.random.split(key)
    x = jax.random.normal(kx, (B, T, D), jnp.float32)
    params = init_params(kp, D, H, C)

    ref_mixed = reference_forward_mixed(x, params)
    ref_f32 = reference_forward_f32(x, params)

    # Default (block_b=None) collapses the grid to (1,) and runs 2 interleaved
    # batch chains; block_b=8 exercises the batch-parallel grid path (v7x-style).
    for block_b in (None, 8):
        out = jax.block_until_ready(title_rnn_forward(x, params, block_b=block_b))
        assert out.shape == (B, C)
        assert jnp.allclose(out, ref_mixed, atol=2e-4, rtol=2e-4), (
            "mixed-precision mismatch:",
            float(jnp.max(jnp.abs(out - ref_mixed))))
        assert float(jnp.max(jnp.abs(out - ref_f32))) < 6e-2, (
            "f32-reference drift too large:",
            float(jnp.max(jnp.abs(out - ref_f32))))

    print("KERNEL_OK")
</pallas_src>

<mosaic_0001>
module attributes {stable_mosaic.version = 11 : i64} {
  func.func @_title_rnn_kernel(%arg0: i32, %arg1: memref<8x16x128xbf16, #tpu.memory_space<vmem>>, %arg2: memref<128x256xbf16, #tpu.memory_space<vmem>>, %arg3: memref<128x128xbf16, #tpu.memory_space<vmem>>, %arg4: memref<1x256xf32, #tpu.memory_space<vmem>>, %arg5: memref<128x128xbf16, #tpu.memory_space<vmem>>, %arg6: memref<128x128xbf16, #tpu.memory_space<vmem>>, %arg7: memref<1x128xf32, #tpu.memory_space<vmem>>, %arg8: memref<128x128xbf16, #tpu.memory_space<vmem>>, %arg9: memref<1x128xf32, #tpu.memory_space<vmem>>, %arg10: memref<16x128xf32, #tpu.memory_space<vmem>>, %arg11: memref<128x128xf32, #tpu.memory_space<vmem>>) attributes {dimension_semantics = [#tpu.dimension_semantics<parallel>], iteration_bounds = array<i64: 1>, scalar_prefetch = 0 : i64, scratch_operands = 1 : i64, tpu.core_type = #tpu.core_type<tc>, window_params = [{transform_indices = @transform_0, window_bounds = array<i64: 8, 16, 128>}, {pipeline_mode = #tpu.pipeline_mode<synchronous>, transform_indices = @transform_1, window_bounds = array<i64: 128, 256>}, {pipeline_mode = #tpu.pipeline_mode<synchronous>, transform_indices = @transform_2, window_bounds = array<i64: 128, 128>}, {pipeline_mode = #tpu.pipeline_mode<synchronous>, transform_indices = @transform_3, window_bounds = array<i64: 1, 256>}, {pipeline_mode = #tpu.pipeline_mode<synchronous>, transform_indices = @transform_4, window_bounds = array<i64: 128, 128>}, {pipeline_mode = #tpu.pipeline_mode<synchronous>, transform_indices = @transform_5, window_bounds = array<i64: 128, 128>}, {pipeline_mode = #tpu.pipeline_mode<synchronous>, transform_indices = @transform_6, window_bounds = array<i64: 1, 128>}, {pipeline_mode = #tpu.pipeline_mode<synchronous>, transform_indices = @transform_7, window_bounds = array<i64: 128, 128>}, {pipeline_mode = #tpu.pipeline_mode<synchronous>, transform_indices = @transform_8, window_bounds = array<i64: 1, 128>}, {transform_indices = @transform_9, window_bounds = array<i64: 16, 128>}]} {
    %c0 = arith.constant 0 : index
    %c0_0 = arith.constant 0 : index
    %c0_1 = arith.constant 0 : index
    %0 = vector.load %arg1[%c0, %c0_0, %c0_1] : memref<8x16x128xbf16, #tpu.memory_space<vmem>>, vector<8x16x128xbf16>
    %1 = vector.shape_cast %0 : vector<8x16x128xbf16> to vector<128x128xbf16>
    %c0_2 = arith.constant 0 : index
    %c0_3 = arith.constant 0 : index
    %2 = vector.load %arg2[%c0_2, %c0_3] : memref<128x256xbf16, #tpu.memory_space<vmem>>, vector<128x256xbf16>
    %cst = arith.constant dense<0.000000e+00> : vector<128x256xf32>
    %3 = tpu.matmul %1, %2, %cst {dimension_numbers = #tpu.dot_dimension_numbers<[1], [0], [0], [1], [0, 0, 1, 1], [], []>} : vector<128x128xbf16>, vector<128x256xbf16>, vector<128x256xf32> -> vector<128x256xf32>
    %c0_4 = arith.constant 0 : index
    %c0_5 = arith.constant 0 : index
    %4 = vector.load %arg4[%c0_4, %c0_5] : memref<1x256xf32, #tpu.memory_space<vmem>>, vector<1x256xf32>
    %5 = vector.broadcast %4 : vector<1x256xf32> to vector<128x256xf32>
    %6 = arith.addf %3, %5 : vector<128x256xf32>
    %7 = vector.extract_strided_slice %6 {offsets = [0, 0], sizes = [128, 128], strides = [1, 1]} : vector<128x256xf32> to vector<128x128xf32>
    %c0_6 = arith.constant 0 : index
    %c0_7 = arith.constant 0 : index
    %8 = vector.load %arg11[%c0_6, %c0_7] : memref<128x128xf32, #tpu.memory_space<vmem>>, vector<128x128xf32>
    tpu.vector_store %arg11[%c0_6, %c0_7], %7 {strides = array<i32>} : memref<128x128xf32, #tpu.memory_space<vmem>>, vector<128x128xf32>,
    %9 = vector.extract_strided_slice %6 {offsets = [112, 128], sizes = [16, 128], strides = [1, 1]} : vector<128x256xf32> to vector<16x128xf32>
    %10 = math.tanh %9 : vector<16x128xf32>
    %c0_8 = arith.constant 0 : index
    %c0_9 = arith.constant 0 : index
    %11 = vector.load %arg3[%c0_8, %c0_9] : memref<128x128xbf16, #tpu.memory_space<vmem>>, vector<128x128xbf16>
    %cst_10 = arith.constant 0.000000e+00 : f32
    %12 = vector.broadcast %cst_10 : f32 to vector<8x128xf32>
    %cst_11 = arith.constant 0.000000e+00 : f32
    %13 = vector.broadcast %cst_11 : f32 to vector<8x128xf32>
    %c0_12 = arith.constant 0 : index
    %c0_13 = arith.constant 0 : index
    %14 = vector.load %arg11[%c0_12, %c0_13] : memref<128x128xf32, #tpu.memory_space<vmem>>, vector<8x128xf32>
    %15 = arith.truncf %12 : vector<8x128xf32> to vector<8x128xbf16>
    %cst_14 = arith.constant dense<0.000000e+00> : vector<8x128xf32>
    %16 = tpu.matmul %15, %11, %cst_14 {dimension_numbers = #tpu.dot_dimension_numbers<[1], [0], [0], [1], [0, 0, 1, 1], [], []>} : vector<8x128xbf16>, vector<128x128xbf16>, vector<8x128xf32> -> vector<8x128xf32>
    %17 = arith.addf %14, %16 : vector<8x128xf32>
    %18 = math.tanh %17 : vector<8x128xf32>
    %c8 = arith.constant 8 : index
    %c0_15 = arith.constant 0 : index
    %19 = vector.load %arg11[%c8, %c0_15] : memref<128x128xf32, #tpu.memory_space<vmem>>, vector<8x128xf32>
    %20 = arith.truncf %13 : vector<8x128xf32> to vector<8x128xbf16>
    %cst_16 = arith.constant dense<0.000000e+00> : vector<8x128xf32>
    %21 = tpu.matmul %20, %11, %cst_16 {dimension_numbers = #tpu.dot_dimension_numbers<[1], [0], [0], [1], [0, 0, 1, 1], [], []>} : vector<8x128xbf16>, vector<128x128xbf16>, vector<8x128xf32> -> vector<8x128xf32>
    %22 = arith.addf %19, %21 : vector<8x128xf32>
    %23 = math.tanh %22 : vector<8x128xf32>
    %c16 = arith.constant 16 : index
    %c0_17 = arith.constant 0 : index
    %24 = vector.load %arg11[%c16, %c0_17] : memref<128x128xf32, #tpu.memory_space<vmem>>, vector<8x128xf32>
    %25 = arith.truncf %18 : vector<8x128xf32> to vector<8x128xbf16>
    %cst_18 = arith.constant dense<0.000000e+00> : vector<8x128xf32>
    %26 = tpu.matmul %25, %11, %cst_18 {dimension_numbers = #tpu.dot_dimension_numbers<[1], [0], [0], [1], [0, 0, 1, 1], [], []>} : vector<8x128xbf16>, vector<128x128xbf16>, vector<8x128xf32> -> vector<8x128xf32>
    %27 = arith.addf %24, %26 : vector<8x128xf32>
    %28 = math.tanh %27 : vector<8x128xf32>
    %c24 = arith.constant 24 : index
    %c0_19 = arith.constant 0 : index
    %29 = vector.load %arg11[%c24, %c0_19] : memref<128x128xf32, #tpu.memory_space<vmem>>, vector<8x128xf32>
    %30 = arith.truncf %23 : vector<8x128xf32> to vector<8x128xbf16>
    %cst_20 = arith.constant dense<0.000000e+00> : vector<8x128xf32>
    %31 = tpu.matmul %30, %11, %cst_20 {dimension_numbers = #tpu.dot_dimension_numbers<[1], [0], [0], [1], [0, 0, 1, 1], [], []>} : vector<8x128xbf16>, vector<128x128xbf16>, vector<8x128xf32> -> vector<8x128xf32>
    %32 = arith.addf %29, %31 : vector<8x128xf32>
    %33 = math.tanh %32 : vector<8x128xf32>
    %c32 = arith.constant 32 : index
    %c0_21 = arith.constant 0 : index
    %34 = vector.load %arg11[%c32, %c0_21] : memref<128x128xf32, #tpu.memory_space<vmem>>, vector<8x128xf32>
    %35 = arith.truncf %28 : vector<8x128xf32> to vector<8x128xbf16>
    %cst_22 = arith.constant dense<0.000000e+00> : vector<8x128xf32>
    %36 = tpu.matmul %35, %11, %cst_22 {dimension_numbers = #tpu.dot_dimension_numbers<[1], [0], [0], [1], [0, 0, 1, 1], [], []>} : vector<8x128xbf16>, vector<128x128xbf16>, vector<8x128xf32> -> vector<8x128xf32>
    %37 = arith.addf %34, %36 : vector<8x128xf32>
    %38 = math.tanh %37 : vector<8x128xf32>
    %c40 = arith.constant 40 : index
    %c0_23 = arith.constant 0 : index
    %39 = vector.load %arg11[%c40, %c0_23] : memref<128x128xf32, #tpu.memory_space<vmem>>, vector<8x128xf32>
    %40 = arith.truncf %33 : vector<8x128xf32> to vector<8x128xbf16>
    %cst_24 = arith.constant dense<0.000000e+00> : vector<8x128xf32>
    %41 = tpu.matmul %40, %11, %cst_24 {dimension_numbers = #tpu.dot_dimension_numbers<[1], [0], [0], [1], [0, 0, 1, 1], [], []>} : vector<8x128xbf16>, vector<128x128xbf16>, vector<8x128xf32> -> vector<8x128xf32>
    %42 = arith.addf %39, %41 : vector<8x128xf32>
    %43 = math.tanh %42 : vector<8x128xf32>
    %c48 = arith.constant 48 : index
    %c0_25 = arith.constant 0 : index
    %44 = vector.load %arg11[%c48, %c0_25] : memref<128x128xf32, #tpu.memory_space<vmem>>, vector<8x128xf32>
    %45 = arith.truncf %38 : vector<8x128xf32> to vector<8x128xbf16>
    %cst_26 = arith.constant dense<0.000000e+00> : vector<8x128xf32>
    %46 = tpu.matmul %45, %11, %cst_26 {dimension_numbers = #tpu.dot_dimension_numbers<[1], [0], [0], [1], [0, 0, 1, 1], [], []>} : vector<8x128xbf16>, vector<128x128xbf16>, vector<8x128xf32> -> vector<8x128xf32>
    %47 = arith.addf %44, %46 : vector<8x128xf32>
    %48 = math.tanh %47 : vector<8x128xf32>
    %c56 = arith.constant 56 : index
    %c0_27 = arith.constant 0 : index
    %49 = vector.load %arg11[%c56, %c0_27] : memref<128x128xf32, #tpu.memory_space<vmem>>, vector<8x128xf32>
    %50 = arith.truncf %43 : vector<8x128xf32> to vector<8x128xbf16>
    %cst_28 = arith.constant dense<0.000000e+00> : vector<8x128xf32>
    %51 = tpu.matmul %50, %11, %cst_28 {dimension_numbers = #tpu.dot_dimension_numbers<[1], [0], [0], [1], [0, 0, 1, 1], [], []>} : vector<8x128xbf16>, vector<128x128xbf16>, vector<8x128xf32> -> vector<8x128xf32>
    %52 = arith.addf %49, %51 : vector<8x128xf32>
    %53 = math.tanh %52 : vector<8x128xf32>
    %c64 = arith.constant 64 : index
    %c0_29 = arith.constant 0 : index
    %54 = vector.load %arg11[%c64, %c0_29] : memref<128x128xf32, #tpu.memory_space<vmem>>, vector<8x128xf32>
    %55 = arith.truncf %48 : vector<8x128xf32> to vector<8x128xbf16>
    %cst_30 = arith.constant dense<0.000000e+00> : vector<8x128xf32>
    %56 = tpu.matmul %55, %11, %cst_30 {dimension_numbers = #tpu.dot_dimension_numbers<[1], [0], [0], [1], [0, 0, 1, 1], [], []>} : vector<8x128xbf16>, vector<128x128xbf16>, vector<8x128xf32> -> vector<8x128xf32>
    %57 = arith.addf %54, %56 : vector<8x128xf32>
    %58 = math.tanh %57 : vector<8x128xf32>
    %c72 = arith.constant 72 : index
    %c0_31 = arith.constant 0 : index
    %59 = vector.load %arg11[%c72, %c0_31] : memref<128x128xf32, #tpu.memory_space<vmem>>, vector<8x128xf32>
    %60 = arith.truncf %53 : vector<8x128xf32> to vector<8x128xbf16>
    %cst_32 = arith.constant dense<0.000000e+00> : vector<8x128xf32>
    %61 = tpu.matmul %60, %11, %cst_32 {dimension_numbers = #tpu.dot_dimension_numbers<[1], [0], [0], [1], [0, 0, 1, 1], [], []>} : vector<8x128xbf16>, vector<128x128xbf16>, vector<8x128xf32> -> vector<8x128xf32>
    %62 = arith.addf %59, %61 : vector<8x128xf32>
    %63 = math.tanh %62 : vector<8x128xf32>
    %c80 = arith.constant 80 : index
    %c0_33 = arith.constant 0 : index
    %64 = vector.load %arg11[%c80, %c0_33] : memref<128x128xf32, #tpu.memory_space<vmem>>, vector<8x128xf32>
    %65 = arith.truncf %58 : vector<8x128xf32> to vector<8x128xbf16>
    %cst_34 = arith.constant dense<0.000000e+00> : vector<8x128xf32>
    %66 = tpu.matmul %65, %11, %cst_34 {dimension_numbers = #tpu.dot_dimension_numbers<[1], [0], [0], [1], [0, 0, 1, 1], [], []>} : vector<8x128xbf16>, vector<128x128xbf16>, vector<8x128xf32> -> vector<8x128xf32>
    %67 = arith.addf %64, %66 : vector<8x128xf32>
    %68 = math.tanh %67 : vector<8x128xf32>
    %c88 = arith.constant 88 : index
    %c0_35 = arith.constant 0 : index
    %69 = vector.load %arg11[%c88, %c0_35] : memref<128x128xf32, #tpu.memory_space<vmem>>, vector<8x128xf32>
    %70 = arith.truncf %63 : vector<8x128xf32> to vector<8x128xbf16>
    %cst_36 = arith.constant dense<0.000000e+00> : vector<8x128xf32>
    %71 = tpu.matmul %70, %11, %cst_36 {dimension_numbers = #tpu.dot_dimension_numbers<[1], [0], [0], [1], [0, 0, 1, 1], [], []>} : vector<8x128xbf16>, vector<128x128xbf16>, vector<8x128xf32> -> vector<8x128xf32>
    %72 = arith.addf %69, %71 : vector<8x128xf32>
    %73 = math.tanh %72 : vector<8x128xf32>
    %c96 = arith.constant 96 : index
    %c0_37 = arith.constant 0 : index
    %74 = vector.load %arg11[%c96, %c0_37] : memref<128x128xf32, #tpu.memory_space<vmem>>, vector<8x128xf32>
    %75 = arith.truncf %68 : vector<8x128xf32> to vector<8x128xbf16>
    %cst_38 = arith.constant dense<0.000000e+00> : vector<8x128xf32>
    %76 = tpu.matmul %75, %11, %cst_38 {dimension_numbers = #tpu.dot_dimension_numbers<[1], [0], [0], [1], [0, 0, 1, 1], [], []>} : vector<8x128xbf16>, vector<128x128xbf16>, vector<8x128xf32> -> vector<8x128xf32>
    %77 = arith.addf %74, %76 : vector<8x128xf32>
    %78 = math.tanh %77 : vector<8x128xf32>
    %c104 = arith.constant 104 : index
    %c0_39 = arith.constant 0 : index
    %79 = vector.load %arg11[%c104, %c0_39] : memref<128x128xf32, #tpu.memory_space<vmem>>, vector<8x128xf32>
    %80 = arith.truncf %73 : vector<8x128xf32> to vector<8x128xbf16>
    %cst_40 = arith.constant dense<0.000000e+00> : vector<8x128xf32>
    %81 = tpu.matmul %80, %11, %cst_40 {dimension_numbers = #tpu.dot_dimension_numbers<[1], [0], [0], [1], [0, 0, 1, 1], [], []>} : vector<8x128xbf16>, vector<128x128xbf16>, vector<8x128xf32> -> vector<8x128xf32>
    %82 = arith.addf %79, %81 : vector<8x128xf32>
    %83 = math.tanh %82 : vector<8x128xf32>
    %c112 = arith.constant 112 : index
    %c0_41 = arith.constant 0 : index
    %84 = vector.load %arg11[%c112, %c0_41] : memref<128x128xf32, #tpu.memory_space<vmem>>, vector<8x128xf32>
    %85 = arith.truncf %78 : vector<8x128xf32> to vector<8x128xbf16>
    %cst_42 = arith.constant dense<0.000000e+00> : vector<8x128xf32>
    %86 = tpu.matmul %85, %11, %cst_42 {dimension_numbers = #tpu.dot_dimension_numbers<[1], [0], [0], [1], [0, 0, 1, 1], [], []>} : vector<8x128xbf16>, vector<128x128xbf16>, vector<8x128xf32> -> vector<8x128xf32>
    %87 = arith.addf %84, %86 : vector<8x128xf32>
    %88 = math.tanh %87 : vector<8x128xf32>
    %c120 = arith.constant 120 : index
    %c0_43 = arith.constant 0 : index
    %89 = vector.load %arg11[%c120, %c0_43] : memref<128x128xf32, #tpu.memory_space<vmem>>, vector<8x128xf32>
    %90 = arith.truncf %83 : vector<8x128xf32> to vector<8x128xbf16>
    %cst_44 = arith.constant dense<0.000000e+00> : vector<8x128xf32>
    %91 = tpu.matmul %90, %11, %cst_44 {dimension_numbers = #tpu.dot_dimension_numbers<[1], [0], [0], [1], [0, 0, 1, 1], [], []>} : vector<8x128xbf16>, vector<128x128xbf16>, vector<8x128xf32> -> vector<8x128xf32>
    %92 = arith.addf %89, %91 : vector<8x128xf32>
    %93 = math.tanh %92 : vector<8x128xf32>
    %c0_45 = arith.constant 0 : index
    %c0_46 = arith.constant 0 : index
    %94 = vector.load %arg7[%c0_45, %c0_46] : memref<1x128xf32, #tpu.memory_space<vmem>>, vector<1x128xf32>
    %c0_47 = arith.constant 0 : index
    %c0_48 = arith.constant 0 : index
    %95 = vector.load %arg9[%c0_47, %c0_48] : memref<1x128xf32, #tpu.memory_space<vmem>>, vector<1x128xf32>
    %96 = vector.extract_strided_slice %10 {offsets = [0, 0], sizes = [8, 128], strides = [1, 1]} : vector<16x128xf32> to vector<8x128xf32>
    %97 = arith.truncf %96 : vector<8x128xf32> to vector<8x128xbf16>
    %98 = arith.truncf %88 : vector<8x128xf32> to vector<8x128xbf16>
    %c0_49 = arith.constant 0 : index
    %c0_50 = arith.constant 0 : index
    %99 = vector.load %arg5[%c0_49, %c0_50] : memref<128x128xbf16, #tpu.memory_space<vmem>>, vector<128x128xbf16>
    %cst_51 = arith.constant dense<0.000000e+00> : vector<8x128xf32>
    %100 = tpu.matmul %98, %99, %cst_51 {dimension_numbers = #tpu.dot_dimension_numbers<[1], [0], [0], [1], [0, 0, 1, 1], [], []>} : vector<8x128xbf16>, vector<128x128xbf16>, vector<8x128xf32> -> vector<8x128xf32>
    %c0_52 = arith.constant 0 : index
    %c0_53 = arith.constant 0 : index
    %101 = vector.load %arg6[%c0_52, %c0_53] : memref<128x128xbf16, #tpu.memory_space<vmem>>, vector<128x128xbf16>
    %cst_54 = arith.constant dense<0.000000e+00> : vector<8x128xf32>
    %102 = tpu.matmul %97, %101, %cst_54 {dimension_numbers = #tpu.dot_dimension_numbers<[1], [0], [0], [1], [0, 0, 1, 1], [], []>} : vector<8x128xbf16>, vector<128x128xbf16>, vector<8x128xf32> -> vector<8x128xf32>
    %103 = arith.addf %100, %102 : vector<8x128xf32>
    %104 = vector.broadcast %94 : vector<1x128xf32> to vector<8x128xf32>
    %105 = arith.addf %103, %104 : vector<8x128xf32>
    %106 = math.tanh %105 : vector<8x128xf32>
    %107 = arith.truncf %106 : vector<8x128xf32> to vector<8x128xbf16>
    %c0_55 = arith.constant 0 : index
    %c0_56 = arith.constant 0 : index
    %108 = vector.load %arg8[%c0_55, %c0_56] : memref<128x128xbf16, #tpu.memory_space<vmem>>, vector<128x128xbf16>
    %cst_57 = arith.constant dense<0.000000e+00> : vector<8x128xf32>
    %109 = tpu.matmul %107, %108, %cst_57 {dimension_numbers = #tpu.dot_dimension_numbers<[1], [0], [0], [1], [0, 0, 1, 1], [], []>} : vector<8x128xbf16>, vector<128x128xbf16>, vector<8x128xf32> -> vector<8x128xf32>
    %110 = vector.broadcast %95 : vector<1x128xf32> to vector<8x128xf32>
    %111 = arith.addf %109, %110 : vector<8x128xf32>
    %112 = math.tanh %111 : vector<8x128xf32>
    %c0_58 = arith.constant 0 : index
    %c0_59 = arith.constant 0 : index
    %113 = vector.load %arg10[%c0_58, %c0_59] : memref<16x128xf32, #tpu.memory_space<vmem>>, vector<8x128xf32>
    tpu.vector_store %arg10[%c0_58, %c0_59], %112 {strides = array<i32>} : memref<16x128xf32, #tpu.memory_space<vmem>>, vector<8x128xf32>,
    %114 = vector.extract_strided_slice %10 {offsets = [8, 0], sizes = [8, 128], strides = [1, 1]} : vector<16x128xf32> to vector<8x128xf32>
    %115 = arith.truncf %114 : vector<8x128xf32> to vector<8x128xbf16>
    %116 = arith.truncf %93 : vector<8x128xf32> to vector<8x128xbf16>
    %c0_60 = arith.constant 0 : index
    %c0_61 = arith.constant 0 : index
    %117 = vector.load %arg5[%c0_60, %c0_61] : memref<128x128xbf16, #tpu.memory_space<vmem>>, vector<128x128xbf16>
    %cst_62 = arith.constant dense<0.000000e+00> : vector<8x128xf32>
    %118 = tpu.matmul %116, %117, %cst_62 {dimension_numbers = #tpu.dot_dimension_numbers<[1], [0], [0], [1], [0, 0, 1, 1], [], []>} : vector<8x128xbf16>, vector<128x128xbf16>, vector<8x128xf32> -> vector<8x128xf32>
    %c0_63 = arith.constant 0 : index
    %c0_64 = arith.constant 0 : index
    %119 = vector.load %arg6[%c0_63, %c0_64] : memref<128x128xbf16, #tpu.memory_space<vmem>>, vector<128x128xbf16>
    %cst_65 = arith.constant dense<0.000000e+00> : vector<8x128xf32>
    %120 = tpu.matmul %115, %119, %cst_65 {dimension_numbers = #tpu.dot_dimension_numbers<[1], [0], [0], [1], [0, 0, 1, 1], [], []>} : vector<8x128xbf16>, vector<128x128xbf16>, vector<8x128xf32> -> vector<8x128xf32>
    %121 = arith.addf %118, %120 : vector<8x128xf32>
    %122 = vector.broadcast %94 : vector<1x128xf32> to vector<8x128xf32>
    %123 = arith.addf %121, %122 : vector<8x128xf32>
    %124 = math.tanh %123 : vector<8x128xf32>
    %125 = arith.truncf %124 : vector<8x128xf32> to vector<8x128xbf16>
    %c0_66 = arith.constant 0 : index
    %c0_67 = arith.constant 0 : index
    %126 = vector.load %arg8[%c0_66, %c0_67] : memref<128x128xbf16, #tpu.memory_space<vmem>>, vector<128x128xbf16>
    %cst_68 = arith.constant dense<0.000000e+00> : vector<8x128xf32>
    %127 = tpu.matmul %125, %126, %cst_68 {dimension_numbers = #tpu.dot_dimension_numbers<[1], [0], [0], [1], [0, 0, 1, 1], [], []>} : vector<8x128xbf16>, vector<128x128xbf16>, vector<8x128xf32> -> vector<8x128xf32>
    %128 = vector.broadcast %95 : vector<1x128xf32> to vector<8x128xf32>
    %129 = arith.addf %127, %128 : vector<8x128xf32>
    %130 = math.tanh %129 : vector<8x128xf32>
    %c8_69 = arith.constant 8 : index
    %c0_70 = arith.constant 0 : index
    %131 = vector.load %arg10[%c8_69, %c0_70] : memref<16x128xf32, #tpu.memory_space<vmem>>, vector<8x128xf32>
    tpu.vector_store %arg10[%c8_69, %c0_70], %130 {strides = array<i32>} : memref<16x128xf32, #tpu.memory_space<vmem>>, vector<8x128xf32>,
    return
  }
  func.func @transform_0(%arg0: i32) -> (i32, i32, i32) {
    %c0_i32 = arith.constant 0 : i32
    %c0_i32_0 = arith.constant 0 : i32
    %c0_i32_1 = arith.constant 0 : i32
    return %c0_i32, %arg0, %c0_i32_0 : i32, i32, i32
  }
  func.func @transform_1(%arg0: i32) -> (i32, i32) {
    %c0_i32 = arith.constant 0 : i32
    %c0_i32_0 = arith.constant 0 : i32
    %c0_i32_1 = arith.constant 0 : i32
    return %c0_i32, %c0_i32_0 : i32, i32
  }
  func.func @transform_2(%arg0: i32) -> (i32, i32) {
    %c0_i32 = arith.constant 0 : i32
    %c0_i32_0 = arith.constant 0 : i32
    %c0_i32_1 = arith.constant 0 : i32
    return %c0_i32, %c0_i32_0 : i32, i32
  }
  func.func @transform_3(%arg0: i32) -> (i32, i32) {
    %c0_i32 = arith.constant 0 : i32
    %c0_i32_0 = arith.constant 0 : i32
    %c0_i32_1 = arith.constant 0 : i32
    return %c0_i32, %c0_i32_0 : i32, i32
  }
  func.func @transform_4(%arg0: i32) -> (i32, i32) {
    %c0_i32 = arith.constant 0 : i32
    %c0_i32_0 = arith.constant 0 : i32
    %c0_i32_1 = arith.constant 0 : i32
    return %c0_i32, %c0_i32_0 : i32, i32
  }
  func.func @transform_5(%arg0: i32) -> (i32, i32) {
    %c0_i32 = arith.constant 0 : i32
    %c0_i32_0 = arith.constant 0 : i32
    %c0_i32_1 = arith.constant 0 : i32
    return %c0_i32, %c0_i32_0 : i32, i32
  }
  func.func @transform_6(%arg0: i32) -> (i32, i32) {
    %c0_i32 = arith.constant 0 : i32
    %c0_i32_0 = arith.constant 0 : i32
    %c0_i32_1 = arith.constant 0 : i32
    return %c0_i32, %c0_i32_0 : i32, i32
  }
  func.func @transform_7(%arg0: i32) -> (i32, i32) {
    %c0_i32 = arith.constant 0 : i32
    %c0_i32_0 = arith.constant 0 : i32
    %c0_i32_1 = arith.constant 0 : i32
    return %c0_i32, %c0_i32_0 : i32, i32
  }
  func.func @transform_8(%arg0: i32) -> (i32, i32) {
    %c0_i32 = arith.constant 0 : i32
    %c0_i32_0 = arith.constant 0 : i32
    %c0_i32_1 = arith.constant 0 : i32
    return %c0_i32, %c0_i32_0 : i32, i32
  }
  func.func @transform_9(%arg0: i32) -> (i32, i32) {
    %c0_i32 = arith.constant 0 : i32
    %c0_i32_0 = arith.constant 0 : i32
    return %arg0, %c0_i32 : i32, i32
  }
}

</mosaic_0001>

<llo_original>
// kernel: tpu_custom_call.1
$region0: #{tpu_custom_call.1}
  #allocation0 [shape = 'u32[]', space=smem, size = 0x4, offset = 0x4, fixed_abs, tag = 'smem constant byte address 0x4 - core index']
  #allocation1 [shape = 'u32[144,128]{1,0:T(1,128)}', space=vmem, size = 0x12000, scoped, tag = 'internal scratch']
  #allocation2 [shape = 'f32[128,128]{1,0:T(8,128)}', space=vmem, size = 0x10000, scoped, tag = 'scratch operand']
  %s0 = inlined_call_operand.hbm [shape: bf16[8,16,128], index: 0, kind: input, shape index: {}]
  %s1 = inlined_call_operand.hbm [shape: bf16[128,256], index: 1, kind: input, shape index: {}]
  %s2 = inlined_call_operand.hbm [shape: bf16[128,128], index: 2, kind: input, shape index: {}]
  %s3 = inlined_call_operand.vmem [shape: f32[1,256], index: 3, kind: input, shape index: {}]
  %s4 = inlined_call_operand.hbm [shape: bf16[128,128], index: 4, kind: input, shape index: {}]
  %s5 = inlined_call_operand.hbm [shape: bf16[128,128], index: 5, kind: input, shape index: {}]
  %s6 = inlined_call_operand.vmem [shape: f32[1,128], index: 6, kind: input, shape index: {}]
  %s7 = inlined_call_operand.hbm [shape: bf16[128,128], index: 7, kind: input, shape index: {}]
  %s8 = inlined_call_operand.vmem [shape: f32[1,128], index: 8, kind: input, shape index: {}]
  %s9 = inlined_call_operand.hbm [shape: f32[16,128], index: 9, kind: output, shape index: {}]
  %s10 = sld [smem:[#allocation0]]
  $region70: #{tpu_custom_call.1} parent=0
    _
  %s12 = ssub.s32 1, %s10
  %s13 = scalar_select 0, %s12, %s10
  $region1: #{tpu_custom_call.1} parent=0
    #allocation3 [shape = 'u8[32768]{0}', space=vmem, size = 0x8000, scoped, tag = 'input window, operand 0, single buffered']
    #allocation4 [shape = 's32[1]{0}', space=sflag, size = 0x4, scoped, tag = 'scoped memory for tpu_custom_call.1']
    #allocation5 [shape = 's32[1]{0}', space=sflag, size = 0x4, scoped, tag = 'scoped memory for tpu_custom_call.1']
    #allocation6 [shape = 'u8[65536]{0}', space=vmem, size = 0x10000, scoped, tag = 'input window, operand 1, single buffered']
    #allocation7 [shape = 's32[1]{0}', space=sflag, size = 0x4, scoped, tag = 'scoped memory for tpu_custom_call.1']
    #allocation8 [shape = 'u8[32768]{0}', space=vmem, size = 0x8000, scoped, tag = 'input window, operand 2, single buffered']
    #allocation9 [shape = 'u8[32768]{0}', space=vmem, size = 0x8000, scoped, tag = 'input window, operand 4, single buffered']
    #allocation10 [shape = 's32[1]{0}', space=sflag, size = 0x4, scoped, tag = 'scoped memory for tpu_custom_call.1']
    #allocation11 [shape = 'u8[32768]{0}', space=vmem, size = 0x8000, scoped, tag = 'input window, operand 5, single buffered']
    #allocation12 [shape = 'u8[32768]{0}', space=vmem, size = 0x8000, scoped, tag = 'input window, operand 7, single buffered']
    #allocation13 [shape = 's32[1]{0}', space=sflag, size = 0x4, scoped, tag = 'scoped memory for tpu_custom_call.1']
    #allocation14 [shape = 'u8[8192]{0}', space=vmem, size = 0x2000, scoped, tag = 'output window, operand 0, single buffered']
    %14 = vsyncpa [#allocation4], 0
    %15 = vsyncpa [#allocation7], 0
    %16 = vsyncpa [#allocation10], 0
    %17 = vsyncpa [#allocation13], 0
    %18 = vsyncpa [#allocation5], 0
    // Predicated region
    $region2: #{tpu_custom_call.1} parent=1 // pred_check
      _
    $region3: #{tpu_custom_call.1} parent=1 // pred_check_branch
      %20 = sbr.rel (0) target = $region5
    $region4: #{tpu_custom_call.1} parent=1 // pred_region
      %s22 = ssub.s32 1024, 1024
      %23 = vsyncadd [#allocation4], %s22
      %s24 = sshll.u32 [#allocation3], 4
      %s25 = int_to_ptr.vmem [resolvable:$true] %s24
      %30 = dma.hbm_to_vmem [thread:$0]  %s0, 1024, %s25, [#allocation4], 64, 64, 4
    $region5: #{tpu_custom_call.1} parent=1 // pred_fallthru
      _
    // Predicated region
    $region6: #{tpu_custom_call.1} parent=1 // pred_check
      _
    $region7: #{tpu_custom_call.1} parent=1 // pred_check_branch
      %32 = sbr.rel (0) target = $region9
    $region8: #{tpu_custom_call.1} parent=1 // pred_region
      %s34 = ssub.s32 2048, 2048
      %35 = vsyncadd [#allocation7], %s34
      %s36 = sshll.u32 [#allocation6], 4
      %s37 = int_to_ptr.vmem [resolvable:$true] %s36
      %42 = dma.hbm_to_vmem [thread:$0]  %s1, 2048, %s37, [#allocation7], 128, 128, 8
    $region9: #{tpu_custom_call.1} parent=1 // pred_fallthru
      _
    // Predicated region
    $region10: #{tpu_custom_call.1} parent=1 // pred_check
      _
    $region11: #{tpu_custom_call.1} parent=1 // pred_check_branch
      %44 = sbr.rel (0) target = $region13
    $region12: #{tpu_custom_call.1} parent=1 // pred_region
      %s46 = ssub.s32 1024, 1024
      %47 = vsyncadd [#allocation7], %s46
      %s48 = sshll.u32 [#allocation8], 4
      %s49 = int_to_ptr.vmem [resolvable:$true] %s48
      %54 = dma.hbm_to_vmem [thread:$0]  %s2, 1024, %s49, [#allocation7], 64, 64, 4
    $region13: #{tpu_custom_call.1} parent=1 // pred_fallthru
      _
    // Predicated region
    $region14: #{tpu_custom_call.1} parent=1 // pred_check
      _
    $region15: #{tpu_custom_call.1} parent=1 // pred_check_branch
      %56 = sbr.rel (0) target = $region17
    $region16: #{tpu_custom_call.1} parent=1 // pred_region
      _
    $region17: #{tpu_custom_call.1} parent=1 // pred_fallthru
      _
    // Predicated region
    $region18: #{tpu_custom_call.1} parent=1 // pred_check
      _
    $region19: #{tpu_custom_call.1} parent=1 // pred_check_branch
      %58 = sbr.rel (0) target = $region21
    $region20: #{tpu_custom_call.1} parent=1 // pred_region
      %s60 = ssub.s32 1024, 1024
      %61 = vsyncadd [#allocation10], %s60
      %s62 = sshll.u32 [#allocation9], 4
      %s63 = int_to_ptr.vmem [resolvable:$true] %s62
      %68 = dma.hbm_to_vmem [thread:$0]  %s4, 1024, %s63, [#allocation10], 64, 64, 4
    $region21: #{tpu_custom_call.1} parent=1 // pred_fallthru
      _
    // Predicated region
    $region22: #{tpu_custom_call.1} parent=1 // pred_check
      _
    $region23: #{tpu_custom_call.1} parent=1 // pred_check_branch
      %70 = sbr.rel (0) target = $region25
    $region24: #{tpu_custom_call.1} parent=1 // pred_region
      %s72 = ssub.s32 1024, 1024
      %73 = vsyncadd [#allocation10], %s72
      %s74 = sshll.u32 [#allocation11], 4
      %s75 = int_to_ptr.vmem [resolvable:$true] %s74
      %80 = dma.hbm_to_vmem [thread:$0]  %s5, 1024, %s75, [#allocation10], 64, 64, 4
    $region25: #{tpu_custom_call.1} parent=1 // pred_fallthru
      _
    // Predicated region
    $region26: #{tpu_custom_call.1} parent=1 // pred_check
      _
    $region27: #{tpu_custom_call.1} parent=1 // pred_check_branch
      %82 = sbr.rel (0) target = $region29
    $region28: #{tpu_custom_call.1} parent=1 // pred_region
      _
    $region29: #{tpu_custom_call.1} parent=1 // pred_fallthru
      _
    // Predicated region
    $region30: #{tpu_custom_call.1} parent=1 // pred_check
      _
    $region31: #{tpu_custom_call.1} parent=1 // pred_check_branch
      %84 = sbr.rel (0) target = $region33
    $region32: #{tpu_custom_call.1} parent=1 // pred_region
      %s86 = ssub.s32 1024, 1024
      %87 = vsyncadd [#allocation13], %s86
      %s88 = sshll.u32 [#allocation12], 4
      %s89 = int_to_ptr.vmem [resolvable:$true] %s88
      %94 = dma.hbm_to_vmem [thread:$0]  %s7, 1024, %s89, [#allocation13], 64, 64, 4
    $region33: #{tpu_custom_call.1} parent=1 // pred_fallthru
      _
    // Predicated region
    $region34: #{tpu_custom_call.1} parent=1 // pred_check
      _
    $region35: #{tpu_custom_call.1} parent=1 // pred_check_branch
      %96 = sbr.rel (0) target = $region37
    $region36: #{tpu_custom_call.1} parent=1 // pred_region
      _
    $region37: #{tpu_custom_call.1} parent=1 // pred_fallthru
      _
    // Predicated region
    $region38: #{tpu_custom_call.1} parent=1 // pred_check
      _
    $region39: #{tpu_custom_call.1} parent=1 // pred_check_branch
      %98 = sbr.rel (0) target = $region41
    $region40: #{tpu_custom_call.1} parent=1 // pred_region
      %99 = dma.done [#allocation4], 1024
    $region41: #{tpu_custom_call.1} parent=1 // pred_fallthru
      _
    // Predicated region
    $region42: #{tpu_custom_call.1} parent=1 // pred_check
      _
    $region43: #{tpu_custom_call.1} parent=1 // pred_check_branch
      %101 = sbr.rel (0) target = $region45
    $region44: #{tpu_custom_call.1} parent=1 // pred_region
      %102 = dma.done [#allocation7], 2048
    $region45: #{tpu_custom_call.1} parent=1 // pred_fallthru
      _
    // Predicated region
    $region46: #{tpu_custom_call.1} parent=1 // pred_check
      _
    $region47: #{tpu_custom_call.1} parent=1 // pred_check_branch
      %104 = sbr.rel (0) target = $region49
    $region48: #{tpu_custom_call.1} parent=1 // pred_region
      %105 = dma.done [#allocation7], 1024
    $region49: #{tpu_custom_call.1} parent=1 // pred_fallthru
      _
    // Predicated region
    $region50: #{tpu_custom_call.1} parent=1 // pred_check
      _
    $region51: #{tpu_custom_call.1} parent=1 // pred_check_branch
      %107 = sbr.rel (0) target = $region53
    $region52: #{tpu_custom_call.1} parent=1 // pred_region
      %108 = dma.done [#allocation10], 1024
    $region53: #{tpu_custom_call.1} parent=1 // pred_fallthru
      _
    // Predicated region
    $region54: #{tpu_custom_call.1} parent=1 // pred_check
      _
    $region55: #{tpu_custom_call.1} parent=1 // pred_check_branch
      %110 = sbr.rel (0) target = $region57
    $region56: #{tpu_custom_call.1} parent=1 // pred_region
      %111 = dma.done [#allocation10], 1024
    $region57: #{tpu_custom_call.1} parent=1 // pred_fallthru
      _
    // Predicated region
    $region58: #{tpu_custom_call.1} parent=1 // pred_check
      _
    $region59: #{tpu_custom_call.1} parent=1 // pred_check_branch
      %113 = sbr.rel (0) target = $region61
    $region60: #{tpu_custom_call.1} parent=1 // pred_region
      %114 = dma.done [#allocation13], 1024
    $region61: #{tpu_custom_call.1} parent=1 // pred_fallthru
      _
    %v116 = vld [vmem:[#allocation3] sm:$0xf]
    %v117 = vld [vmem:[#allocation3 + $0x4] sm:$0xf]
    %v118 = vld [vmem:[#allocation3 + $0x8] sm:$0xf]
    %v119 = vld [vmem:[#allocation3 + $0xc] sm:$0xf]
    %v120 = vld [vmem:[#allocation3 + $0x10] sm:$0xf]
    %v121 = vld [vmem:[#allocation3 + $0x14] sm:$0xf]
    %v122 = vld [vmem:[#allocation3 + $0x18] sm:$0xf]
    %v123 = vld [vmem:[#allocation3 + $0x1c] sm:$0xf]
    %v124 = vld [vmem:[#allocation3 + $0x20] sm:$0xf]
    %v125 = vld [vmem:[#allocation3 + $0x24] sm:$0xf]
    %v126 = vld [vmem:[#allocation3 + $0x28] sm:$0xf]
    %v127 = vld [vmem:[#allocation3 + $0x2c] sm:$0xf]
    %v128 = vld [vmem:[#allocation3 + $0x30] sm:$0xf]
    %v129 = vld [vmem:[#allocation3 + $0x34] sm:$0xf]
    %v130 = vld [vmem:[#allocation3 + $0x38] sm:$0xf]
    %v131 = vld [vmem:[#allocation3 + $0x3c] sm:$0xf]
    %v132 = vld [vmem:[#allocation6] sm:$0xff]
    %v133 = vld [vmem:[#allocation6 + $0x8] sm:$0xff]
    %v134 = vld [vmem:[#allocation6 + $0x10] sm:$0xff]
    %v135 = vld [vmem:[#allocation6 + $0x18] sm:$0xff]
    %v136 = vld [vmem:[#allocation6 + $0x20] sm:$0xff]
    %v137 = vld [vmem:[#allocation6 + $0x28] sm:$0xff]
    %v138 = vld [vmem:[#allocation6 + $0x30] sm:$0xff]
    %v139 = vld [vmem:[#allocation6 + $0x38] sm:$0xff]
    %v140 = vld [vmem:[#allocation6 + $0x40] sm:$0xff]
    %v141 = vld [vmem:[#allocation6 + $0x48] sm:$0xff]
    %v142 = vld [vmem:[#allocation6 + $0x50] sm:$0xff]
    %v143 = vld [vmem:[#allocation6 + $0x58] sm:$0xff]
    %v144 = vld [vmem:[#allocation6 + $0x60] sm:$0xff]
    %v145 = vld [vmem:[#allocation6 + $0x68] sm:$0xff]
    %v146 = vld [vmem:[#allocation6 + $0x70] sm:$0xff]
    %v147 = vld [vmem:[#allocation6 + $0x78] sm:$0xff]
    %v148 = vld [vmem:[%s3] sm:$0x3]
    %v150 = vlaneseq
    %v151 = vshrl.u32 %v150, 7
    %v152 = vsub.s32 0, %v151
    %v153 = vrot.slane %v148, %v152
    %v154 = vlaneseq
    %v155 = vshrl.u32 %v154, 7
    %v156 = vsub.s32 1, %v155
    %v157 = vrot.slane %v148, %v156
    %v176 = vunpack.c.l.b16 %v116
    %v177 = vunpack.c.l.b16 %v117
    %v178 = vunpack.c.l.b16 %v118
    %v179 = vunpack.c.l.b16 %v119
    %v180 = vunpack.c.l.b16 %v120
    %v181 = vunpack.c.l.b16 %v121
    %v182 = vunpack.c.l.b16 %v122
    %v183 = vunpack.c.l.b16 %v123
    %v184 = vunpack.c.l.b16 %v124
    %v185 = vunpack.c.l.b16 %v125
    %v186 = vunpack.c.l.b16 %v126
    %v187 = vunpack.c.l.b16 %v127
    %v188 = vunpack.c.l.b16 %v128
    %v189 = vunpack.c.l.b16 %v129
    %v190 = vunpack.c.l.b16 %v130
    %v191 = vunpack.c.l.b16 %v131
    %v192 = vpack.c.b16 %v177, %v176
    %v193 = vpack.c.b16 %v179, %v178
    %v194 = vpack.c.b16 %v181, %v180
    %v195 = vpack.c.b16 %v183, %v182
    %v196 = vpack.c.b16 %v185, %v184
    %v197 = vpack.c.b16 %v187, %v186
    %v198 = vpack.c.b16 %v189, %v188
    %v199 = vpack.c.b16 %v191, %v190
    %v224 = vunpack.c.l.b16 %v132
    %v225 = vunpack.c.h.b16 %v132
    %v226 = vunpack.c.l.b16 %v133
    %v227 = vunpack.c.h.b16 %v133
    %v228 = vunpack.c.l.b16 %v134
    %v229 = vunpack.c.h.b16 %v134
    %v230 = vunpack.c.l.b16 %v135
    %v231 = vunpack.c.h.b16 %v135
    %v232 = vunpack.c.l.b16 %v136
    %v233 = vunpack.c.h.b16 %v136
    %v234 = vunpack.c.l.b16 %v137
    %v235 = vunpack.c.h.b16 %v137
    %v236 = vunpack.c.l.b16 %v138
    %v237 = vunpack.c.h.b16 %v138
    %v238 = vunpack.c.l.b16 %v139
    %v239 = vunpack.c.h.b16 %v139
    %v240 = vunpack.c.l.b16 %v140
    %v241 = vunpack.c.h.b16 %v140
    %v242 = vunpack.c.l.b16 %v141
    %v243 = vunpack.c.h.b16 %v141
    %v244 = vunpack.c.l.b16 %v142
    %v245 = vunpack.c.h.b16 %v142
    %v246 = vunpack.c.l.b16 %v143
    %v247 = vunpack.c.h.b16 %v143
    %v248 = vunpack.c.l.b16 %v144
    %v249 = vunpack.c.h.b16 %v144
    %v250 = vunpack.c.l.b16 %v145
    %v251 = vunpack.c.h.b16 %v145
    %v252 = vunpack.c.l.b16 %v146
    %v253 = vunpack.c.h.b16 %v146
    %v254 = vunpack.c.l.b16 %v147
    %v255 = vunpack.c.h.b16 %v147
    %v256 = vpack.c.b16 %v226, %v224
    %v257 = vpack.c.b16 %v227, %v225
    %v258 = vpack.c.b16 %v230, %v228
    %v259 = vpack.c.b16 %v231, %v229
    %v260 = vpack.c.b16 %v234, %v232
    %v261 = vpack.c.b16 %v235, %v233
    %v262 = vpack.c.b16 %v238, %v236
    %v263 = vpack.c.b16 %v239, %v237
    %v264 = vpack.c.b16 %v242, %v240
    %v265 = vpack.c.b16 %v243, %v241
    %v266 = vpack.c.b16 %v246, %v244
    %v267 = vpack.c.b16 %v247, %v245
    %v268 = vpack.c.b16 %v250, %v248
    %v269 = vpack.c.b16 %v251, %v249
    %v270 = vpack.c.b16 %v254, %v252
    %v271 = vpack.c.b16 %v255, %v253
    %288 = vmatprep.subr.bf16.mxu0 %v257
    %289 = vmatpush1.bf16.msra.mxu0 %v256
    %290 = vmatprep.subr.bf16.mxu0 %v259
    %291 = vmatpush1.bf16.msra.mxu0 %v258
    %292 = vmatprep.subr.bf16.mxu0 %v261
    %293 = vmatpush1.bf16.msra.mxu0 %v260
    %294 = vmatprep.subr.bf16.mxu0 %v263
    %295 = vmatpush1.bf16.msra.mxu0 %v262
    %296 = vmatprep.subr.bf16.mxu0 %v265
    %297 = vmatpush1.bf16.msra.mxu0 %v264
    %298 = vmatprep.subr.bf16.mxu0 %v267
    %299 = vmatpush1.bf16.msra.mxu0 %v266
    %300 = vmatprep.subr.bf16.mxu0 %v269
    %301 = vmatpush1.bf16.msra.mxu0 %v268
    %302 = vmatprep.subr.bf16.mxu0 %v271
    %303 = vmatpush1.bf16.msra.mxu0 %v270
    %304 = vmatprep.subr.bf16.mxu0 0
    %305 = vmatpush1.bf16.msra.mxu0 0
    %306 = vmatprep.subr.bf16.mxu0 0
    %307 = vmatpush1.bf16.msra.mxu0 0
    %308 = vmatprep.subr.bf16.mxu0 0
    %309 = vmatpush1.bf16.msra.mxu0 0
    %310 = vmatprep.subr.bf16.mxu0 0
    %311 = vmatpush1.bf16.msra.mxu0 0
    %312 = vmatprep.subr.bf16.mxu0 0
    %313 = vmatpush1.bf16.msra.mxu0 0
    %314 = vmatprep.subr.bf16.mxu0 0
    %315 = vmatpush1.bf16.msra.mxu0 0
    %316 = vmatprep.subr.bf16.mxu0 0
    %317 = vmatpush1.bf16.msra.mxu0 0
    %318 = vmatprep.subr.bf16.mxu0 0
    %319 = vmatpush1.bf16.msra.mxu0 0
    %320 = vmatprep.mubr.bf16.mxu0 0
    %321 = vmatmul.mubr.bf16.gmra.mrb[0].mxu0 %v192
    %v322 = vpop.f32.mrb[0].mxu0
    %v323 = vadd.f32 %v153, %v322
    %v324 = vpop.f32.mrb[0].mxu0
    %v325 = vpop.f32.mrb[0].mxu0
    %v326 = vadd.f32 %v153, %v325
    %v327 = vpop.f32.mrb[0].mxu0
    %328 = vmatprep.mubr.bf16.mxu0 0
    %329 = vmatmul.mubr.bf16.gmra.mrb[0].mxu0 %v193
    %v330 = vpop.f32.mrb[0].mxu0
    %v331 = vadd.f32 %v153, %v330
    %v332 = vpop.f32.mrb[0].mxu0
    %v333 = vpop.f32.mrb[0].mxu0
    %v334 = vadd.f32 %v153, %v333
    %v335 = vpop.f32.mrb[0].mxu0
    %336 = vmatprep.mubr.bf16.mxu0 0
    %337 = vmatmul.mubr.bf16.gmra.mrb[0].mxu0 %v194
    %v338 = vpop.f32.mrb[0].mxu0
    %v339 = vadd.f32 %v153, %v338
    %v340 = vpop.f32.mrb[0].mxu0
    %v341 = vpop.f32.mrb[0].mxu0
    %v342 = vadd.f32 %v153, %v341
    %v343 = vpop.f32.mrb[0].mxu0
    %344 = vmatprep.mubr.bf16.mxu0 0
    %345 = vmatmul.mubr.bf16.gmra.mrb[0].mxu0 %v195
    %v346 = vpop.f32.mrb[0].mxu0
    %v347 = vadd.f32 %v153, %v346
    %v348 = vpop.f32.mrb[0].mxu0
    %v349 = vpop.f32.mrb[0].mxu0
    %v350 = vadd.f32 %v153, %v349
    %v351 = vpop.f32.mrb[0].mxu0
    %352 = vmatprep.mubr.bf16.mxu0 0
    %353 = vmatmul.mubr.bf16.gmra.mrb[0].mxu0 %v196
    %v354 = vpop.f32.mrb[0].mxu0
    %v355 = vadd.f32 %v153, %v354
    %v356 = vpop.f32.mrb[0].mxu0
    %v357 = vpop.f32.mrb[0].mxu0
    %v358 = vadd.f32 %v153, %v357
    %v359 = vpop.f32.mrb[0].mxu0
    %360 = vmatprep.mubr.bf16.mxu0 0
    %361 = vmatmul.mubr.bf16.gmra.mrb[0].mxu0 %v197
    %v362 = vpop.f32.mrb[0].mxu0
    %v363 = vadd.f32 %v153, %v362
    %v364 = vpop.f32.mrb[0].mxu0
    %v365 = vpop.f32.mrb[0].mxu0
    %v366 = vadd.f32 %v153, %v365
    %v367 = vpop.f32.mrb[0].mxu0
    %368 = vmatprep.mubr.bf16.mxu0 0
    %369 = vmatmul.mubr.bf16.gmra.mrb[0].mxu0 %v198
    %v370 = vpop.f32.mrb[0].mxu0
    %v371 = vadd.f32 %v153, %v370
    %v372 = vpop.f32.mrb[0].mxu0
    %v373 = vpop.f32.mrb[0].mxu0
    %v374 = vadd.f32 %v153, %v373
    %v375 = vpop.f32.mrb[0].mxu0
    %376 = vmatprep.mubr.bf16.mxu0 0
    %377 = vmatmul.mubr.bf16.gmra.mrb[0].mxu0 %v199
    %v378 = vpop.f32.mrb[0].mxu0
    %v379 = vadd.f32 %v153, %v378
    %v380 = vpop.f32.mrb[0].mxu0
    %v381 = vadd.f32 %v157, %v380
    %v382 = vpop.f32.mrb[0].mxu0
    %v383 = vadd.f32 %v153, %v382
    %v384 = vpop.f32.mrb[0].mxu0
    %v385 = vadd.f32 %v157, %v384
    %386 = vdwg.mxu0
    %387 = vst [vmem:[#allocation2] sm:$0xff] %v323
    %388 = vst [vmem:[#allocation2 + $0x8] sm:$0xff] %v326
    %389 = vst [vmem:[#allocation2 + $0x10] sm:$0xff] %v331
    %390 = vst [vmem:[#allocation2 + $0x18] sm:$0xff] %v334
    %391 = vst [vmem:[#allocation2 + $0x20] sm:$0xff] %v339
    %392 = vst [vmem:[#allocation2 + $0x28] sm:$0xff] %v342
    %393 = vst [vmem:[#allocation2 + $0x30] sm:$0xff] %v347
    %394 = vst [vmem:[#allocation2 + $0x38] sm:$0xff] %v350
    %395 = vst [vmem:[#allocation2 + $0x40] sm:$0xff] %v355
    %396 = vst [vmem:[#allocation2 + $0x48] sm:$0xff] %v358
    %397 = vst [vmem:[#allocation2 + $0x50] sm:$0xff] %v363
    %398 = vst [vmem:[#allocation2 + $0x58] sm:$0xff] %v366
    %399 = vst [vmem:[#allocation2 + $0x60] sm:$0xff] %v371
    %400 = vst [vmem:[#allocation2 + $0x68] sm:$0xff] %v374
    %401 = vst [vmem:[#allocation2 + $0x70] sm:$0xff] %v379
    %402 = vst [vmem:[#allocation2 + $0x78] sm:$0xff] %v383
    %v403 = vtanh.pop %v381
    %v404 = vtanh.pop %v385
    %v405 = vld [vmem:[#allocation8] sm:$0xf]
    %v406 = vld [vmem:[#allocation8 + $0x4] sm:$0xf]
    %v407 = vld [vmem:[#allocation8 + $0x8] sm:$0xf]
    %v408 = vld [vmem:[#allocation8 + $0xc] sm:$0xf]
    %v409 = vld [vmem:[#allocation8 + $0x10] sm:$0xf]
    %v410 = vld [vmem:[#allocation8 + $0x14] sm:$0xf]
    %v411 = vld [vmem:[#allocation8 + $0x18] sm:$0xf]
    %v412 = vld [vmem:[#allocation8 + $0x1c] sm:$0xf]
    %v413 = vld [vmem:[#allocation8 + $0x20] sm:$0xf]
    %v414 = vld [vmem:[#allocation8 + $0x24] sm:$0xf]
    %v415 = vld [vmem:[#allocation8 + $0x28] sm:$0xf]
    %v416 = vld [vmem:[#allocation8 + $0x2c] sm:$0xf]
    %v417 = vld [vmem:[#allocation8 + $0x30] sm:$0xf]
    %v418 = vld [vmem:[#allocation8 + $0x34] sm:$0xf]
    %v419 = vld [vmem:[#allocation8 + $0x38] sm:$0xf]
    %v420 = vld [vmem:[#allocation8 + $0x3c] sm:$0xf]
    %v421 = vld [vmem:[#allocation2] sm:$0xff]
    %v438 = vunpack.c.l.b16 %v405
    %v439 = vunpack.c.l.b16 %v406
    %v440 = vunpack.c.l.b16 %v407
    %v441 = vunpack.c.l.b16 %v408
    %v442 = vunpack.c.l.b16 %v409
    %v443 = vunpack.c.l.b16 %v410
    %v444 = vunpack.c.l.b16 %v411
    %v445 = vunpack.c.l.b16 %v412
    %v446 = vunpack.c.l.b16 %v413
    %v447 = vunpack.c.l.b16 %v414
    %v448 = vunpack.c.l.b16 %v415
    %v449 = vunpack.c.l.b16 %v416
    %v450 = vunpack.c.l.b16 %v417
    %v451 = vunpack.c.l.b16 %v418
    %v452 = vunpack.c.l.b16 %v419
    %v453 = vunpack.c.l.b16 %v420
    %v454 = vpack.c.b16 %v439, %v438
    %v455 = vpack.c.b16 %v441, %v440
    %v456 = vpack.c.b16 %v443, %v442
    %v457 = vpack.c.b16 %v445, %v444
    %v458 = vpack.c.b16 %v447, %v446
    %v459 = vpack.c.b16 %v449, %v448
    %v460 = vpack.c.b16 %v451, %v450
    %v461 = vpack.c.b16 %v453, %v452
    %470 = vmatprep.subr.bf16.mxu0 0
    %471 = vmatpush1.bf16.msra.mxu0 %v454
    %472 = vmatprep.subr.bf16.mxu0 0
    %473 = vmatpush1.bf16.msra.mxu0 %v455
    %474 = vmatprep.subr.bf16.mxu0 0
    %475 = vmatpush1.bf16.msra.mxu0 %v456
    %476 = vmatprep.subr.bf16.mxu0 0
    %477 = vmatpush1.bf16.msra.mxu0 %v457
    %478 = vmatprep.subr.bf16.mxu0 0
    %479 = vmatpush1.bf16.msra.mxu0 %v458
    %480 = vmatprep.subr.bf16.mxu0 0
    %481 = vmatpush1.bf16.msra.mxu0 %v459
    %482 = vmatprep.subr.bf16.mxu0 0
    %483 = vmatpush1.bf16.msra.mxu0 %v460
    %484 = vmatprep.subr.bf16.mxu0 0
    %485 = vmatpush1.bf16.msra.mxu0 %v461
    %486 = vmatprep.subr.bf16.mxu0 0
    %487 = vmatpush1.bf16.msra.mxu0 0
    %488 = vmatprep.subr.bf16.mxu0 0
    %489 = vmatpush1.bf16.msra.mxu0 0
    %490 = vmatprep.subr.bf16.mxu0 0
    %491 = vmatpush1.bf16.msra.mxu0 0
    %492 = vmatprep.subr.bf16.mxu0 0
    %493 = vmatpush1.bf16.msra.mxu0 0
    %494 = vmatprep.subr.bf16.mxu0 0
    %495 = vmatpush1.bf16.msra.mxu0 0
    %496 = vmatprep.subr.bf16.mxu0 0
    %497 = vmatpush1.bf16.msra.mxu0 0
    %498 = vmatprep.subr.bf16.mxu0 0
    %499 = vmatpush1.bf16.msra.mxu0 0
    %500 = vmatprep.subr.bf16.mxu0 0
    %501 = vmatpush1.bf16.msra.mxu0 0
    %502 = vmatprep.mubr.bf16.mxu0 0
    %503 = vmatmul.mubr.bf16.gmra.mrb[0].mxu0 0
    %v504 = vpop.f32.mrb[0].mxu0
    %v505 = vadd.f32 0.0, %v504
    %v506 = vpop.f32.mrb[0].mxu0
    %v507 = vpop.f32.mrb[0].mxu0
    %v508 = vpop.f32.mrb[0].mxu0
    %509 = vdwg.mxu0
    %v510 = vadd.f32 %v421, %v505
    %v511 = vtanh.pop %v510
    %v512 = vld [vmem:[#allocation2 + $0x8] sm:$0xff]
    %v513 = vadd.f32 %v512, %v505
    %v514 = vtanh.pop %v513
    %v515 = vld [vmem:[#allocation2 + $0x10] sm:$0xff]
    %v516 = vpack.c.bf16 %v511, %v511
    %517 = vmatprep.subr.bf16.mxu0 0
    %518 = vmatpush1.bf16.msra.mxu0 %v454
    %519 = vmatprep.subr.bf16.mxu0 0
    %520 = vmatpush1.bf16.msra.mxu0 %v455
    %521 = vmatprep.subr.bf16.mxu0 0
    %522 = vmatpush1.bf16.msra.mxu0 %v456
    %523 = vmatprep.subr.bf16.mxu0 0
    %524 = vmatpush1.bf16.msra.mxu0 %v457
    %525 = vmatprep.subr.bf16.mxu0 0
    %526 = vmatpush1.bf16.msra.mxu0 %v458
    %527 = vmatprep.subr.bf16.mxu0 0
    %528 = vmatpush1.bf16.msra.mxu0 %v459
    %529 = vmatprep.subr.bf16.mxu0 0
    %530 = vmatpush1.bf16.msra.mxu0 %v460
    %531 = vmatprep.subr.bf16.mxu0 0
    %532 = vmatpush1.bf16.msra.mxu0 %v461
    %533 = vmatprep.subr.bf16.mxu0 0
    %534 = vmatpush1.bf16.msra.mxu0 0
    %535 = vmatprep.subr.bf16.mxu0 0
    %536 = vmatpush1.bf16.msra.mxu0 0
    %537 = vmatprep.subr.bf16.mxu0 0
    %538 = vmatpush1.bf16.msra.mxu0 0
    %539 = vmatprep.subr.bf16.mxu0 0
    %540 = vmatpush1.bf16.msra.mxu0 0
    %541 = vmatprep.subr.bf16.mxu0 0
    %542 = vmatpush1.bf16.msra.mxu0 0
    %543 = vmatprep.subr.bf16.mxu0 0
    %544 = vmatpush1.bf16.msra.mxu0 0
    %545 = vmatprep.subr.bf16.mxu0 0
    %546 = vmatpush1.bf16.msra.mxu0 0
    %547 = vmatprep.subr.bf16.mxu0 0
    %548 = vmatpush1.bf16.msra.mxu0 0
    %549 = vmatprep.mubr.bf16.mxu0 0
    %550 = vmatmul.mubr.bf16.gmra.mrb[0].mxu0 %v516
    %v551 = vpop.f32.mrb[0].mxu0
    %v552 = vadd.f32 0.0, %v551
    %v553 = vpop.f32.mrb[0].mxu0
    %v554 = vpop.f32.mrb[0].mxu0
    %v555 = vpop.f32.mrb[0].mxu0
    %556 = vdwg.mxu0
    %v557 = vadd.f32 %v515, %v552
    %v558 = vtanh.pop %v557
    %v559 = vld [vmem:[#allocation2 + $0x18] sm:$0xff]
    %v560 = vpack.c.bf16 %v514, %v514
    %561 = vmatprep.subr.bf16.mxu0 0
    %562 = vmatpush1.bf16.msra.mxu0 %v454
    %563 = vmatprep.subr.bf16.mxu0 0
    %564 = vmatpush1.bf16.msra.mxu0 %v455
    %565 = vmatprep.subr.bf16.mxu0 0
    %566 = vmatpush1.bf16.msra.mxu0 %v456
    %567 = vmatprep.subr.bf16.mxu0 0
    %568 = vmatpush1.bf16.msra.mxu0 %v457
    %569 = vmatprep.subr.bf16.mxu0 0
    %570 = vmatpush1.bf16.msra.mxu0 %v458
    %571 = vmatprep.subr.bf16.mxu0 0
    %572 = vmatpush1.bf16.msra.mxu0 %v459
    %573 = vmatprep.subr.bf16.mxu0 0
    %574 = vmatpush1.bf16.msra.mxu0 %v460
    %575 = vmatprep.subr.bf16.mxu0 0
    %576 = vmatpush1.bf16.msra.mxu0 %v461
    %577 = vmatprep.subr.bf16.mxu0 0
    %578 = vmatpush1.bf16.msra.mxu0 0
    %579 = vmatprep.subr.bf16.mxu0 0
    %580 = vmatpush1.bf16.msra.mxu0 0
    %581 = vmatprep.subr.bf16.mxu0 0
    %582 = vmatpush1.bf16.msra.mxu0 0
    %583 = vmatprep.subr.bf16.mxu0 0
    %584 = vmatpush1.bf16.msra.mxu0 0
    %585 = vmatprep.subr.bf16.mxu0 0
    %586 = vmatpush1.bf16.msra.mxu0 0
    %587 = vmatprep.subr.bf16.mxu0 0
    %588 = vmatpush1.bf16.msra.mxu0 0
    %589 = vmatprep.subr.bf16.mxu0 0
    %590 = vmatpush1.bf16.msra.mxu0 0
    %591 = vmatprep.subr.bf16.mxu0 0
    %592 = vmatpush1.bf16.msra.mxu0 0
    %593 = vmatprep.mubr.bf16.mxu0 0
    %594 = vmatmul.mubr.bf16.gmra.mrb[0].mxu0 %v560
    %v595 = vpop.f32.mrb[0].mxu0
    %v596 = vadd.f32 0.0, %v595
    %v597 = vpop.f32.mrb[0].mxu0
    %v598 = vpop.f32.mrb[0].mxu0
    %v599 = vpop.f32.mrb[0].mxu0
    %600 = vdwg.mxu0
    %v601 = vadd.f32 %v559, %v596
    %v602 = vtanh.pop %v601
    %v603 = vld [vmem:[#allocation2 + $0x20] sm:$0xff]
    %v604 = vpack.c.bf16 %v558, %v558
    %605 = vmatprep.subr.bf16.mxu0 0
    %606 = vmatpush1.bf16.msra.mxu0 %v454
    %607 = vmatprep.subr.bf16.mxu0 0
    %608 = vmatpush1.bf16.msra.mxu0 %v455
    %609 = vmatprep.subr.bf16.mxu0 0
    %610 = vmatpush1.bf16.msra.mxu0 %v456
    %611 = vmatprep.subr.bf16.mxu0 0
    %612 = vmatpush1.bf16.msra.mxu0 %v457
    %613 = vmatprep.subr.bf16.mxu0 0
    %614 = vmatpush1.bf16.msra.mxu0 %v458
    %615 = vmatprep.subr.bf16.mxu0 0
    %616 = vmatpush1.bf16.msra.mxu0 %v459
    %617 = vmatprep.subr.bf16.mxu0 0
    %618 = vmatpush1.bf16.msra.mxu0 %v460
    %619 = vmatprep.subr.bf16.mxu0 0
    %620 = vmatpush1.bf16.msra.mxu0 %v461
    %621 = vmatprep.subr.bf16.mxu0 0
    %622 = vmatpush1.bf16.msra.mxu0 0
    %623 = vmatprep.subr.bf16.mxu0 0
    %624 = vmatpush1.bf16.msra.mxu0 0
    %625 = vmatprep.subr.bf16.mxu0 0
    %626 = vmatpush1.bf16.msra.mxu0 0
    %627 = vmatprep.subr.bf16.mxu0 0
    %628 = vmatpush1.bf16.msra.mxu0 0
    %629 = vmatprep.subr.bf16.mxu0 0
    %630 = vmatpush1.bf16.msra.mxu0 0
    %631 = vmatprep.subr.bf16.mxu0 0
    %632 = vmatpush1.bf16.msra.mxu0 0
    %633 = vmatprep.subr.bf16.mxu0 0
    %634 = vmatpush1.bf16.msra.mxu0 0
    %635 = vmatprep.subr.bf16.mxu0 0
    %636 = vmatpush1.bf16.msra.mxu0 0
    %637 = vmatprep.mubr.bf16.mxu0 0
    %638 = vmatmul.mubr.bf16.gmra.mrb[0].mxu0 %v604
    %v639 = vpop.f32.mrb[0].mxu0
    %v640 = vadd.f32 0.0, %v639
    %v641 = vpop.f32.mrb[0].mxu0
    %v642 = vpop.f32.mrb[0].mxu0
    %v643 = vpop.f32.mrb[0].mxu0
    %644 = vdwg.mxu0
    %v645 = vadd.f32 %v603, %v640
    %v646 = vtanh.pop %v645
    %v647 = vld [vmem:[#allocation2 + $0x28] sm:$0xff]
    %v648 = vpack.c.bf16 %v602, %v602
    %649 = vmatprep.subr.bf16.mxu0 0
    %650 = vmatpush1.bf16.msra.mxu0 %v454
    %651 = vmatprep.subr.bf16.mxu0 0
    %652 = vmatpush1.bf16.msra.mxu0 %v455
    %653 = vmatprep.subr.bf16.mxu0 0
    %654 = vmatpush1.bf16.msra.mxu0 %v456
    %655 = vmatprep.subr.bf16.mxu0 0
    %656 = vmatpush1.bf16.msra.mxu0 %v457
    %657 = vmatprep.subr.bf16.mxu0 0
    %658 = vmatpush1.bf16.msra.mxu0 %v458
    %659 = vmatprep.subr.bf16.mxu0 0
    %660 = vmatpush1.bf16.msra.mxu0 %v459
    %661 = vmatprep.subr.bf16.mxu0 0
    %662 = vmatpush1.bf16.msra.mxu0 %v460
    %663 = vmatprep.subr.bf16.mxu0 0
    %664 = vmatpush1.bf16.msra.mxu0 %v461
    %665 = vmatprep.subr.bf16.mxu0 0
    %666 = vmatpush1.bf16.msra.mxu0 0
    %667 = vmatprep.subr.bf16.mxu0 0
    %668 = vmatpush1.bf16.msra.mxu0 0
    %669 = vmatprep.subr.bf16.mxu0 0
    %670 = vmatpush1.bf16.msra.mxu0 0
    %671 = vmatprep.subr.bf16.mxu0 0
    %672 = vmatpush1.bf16.msra.mxu0 0
    %673 = vmatprep.subr.bf16.mxu0 0
    %674 = vmatpush1.bf16.msra.mxu0 0
    %675 = vmatprep.subr.bf16.mxu0 0
    %676 = vmatpush1.bf16.msra.mxu0 0
    %677 = vmatprep.subr.bf16.mxu0 0
    %678 = vmatpush1.bf16.msra.mxu0 0
    %679 = vmatprep.subr.bf16.mxu0 0
    %680 = vmatpush1.bf16.msra.mxu0 0
    %681 = vmatprep.mubr.bf16.mxu0 0
    %682 = vmatmul.mubr.bf16.gmra.mrb[0].mxu0 %v648
    %v683 = vpop.f32.mrb[0].mxu0
    %v684 = vadd.f32 0.0, %v683
    %v685 = vpop.f32.mrb[0].mxu0
    %v686 = vpop.f32.mrb[0].mxu0
    %v687 = vpop.f32.mrb[0].mxu0
    %688 = vdwg.mxu0
    %v689 = vadd.f32 %v647, %v684
    %v690 = vtanh.pop %v689
    %v691 = vld [vmem:[#allocation2 + $0x30] sm:$0xff]
    %v692 = vpack.c.bf16 %v646, %v646
    %693 = vmatprep.subr.bf16.mxu0 0
    %694 = vmatpush1.bf16.msra.mxu0 %v454
    %695 = vmatprep.subr.bf16.mxu0 0
    %696 = vmatpush1.bf16.msra.mxu0 %v455
    %697 = vmatprep.subr.bf16.mxu0 0
    %698 = vmatpush1.bf16.msra.mxu0 %v456
    %699 = vmatprep.subr.bf16.mxu0 0
    %700 = vmatpush1.bf16.msra.mxu0 %v457
    %701 = vmatprep.subr.bf16.mxu0 0
    %702 = vmatpush1.bf16.msra.mxu0 %v458
    %703 = vmatprep.subr.bf16.mxu0 0
    %704 = vmatpush1.bf16.msra.mxu0 %v459
    %705 = vmatprep.subr.bf16.mxu0 0
    %706 = vmatpush1.bf16.msra.mxu0 %v460
    %707 = vmatprep.subr.bf16.mxu0 0
    %708 = vmatpush1.bf16.msra.mxu0 %v461
    %709 = vmatprep.subr.bf16.mxu0 0
    %710 = vmatpush1.bf16.msra.mxu0 0
    %711 = vmatprep.subr.bf16.mxu0 0
    %712 = vmatpush1.bf16.msra.mxu0 0
    %713 = vmatprep.subr.bf16.mxu0 0
    %714 = vmatpush1.bf16.msra.mxu0 0
    %715 = vmatprep.subr.bf16.mxu0 0
    %716 = vmatpush1.bf16.msra.mxu0 0
    %717 = vmatprep.subr.bf16.mxu0 0
    %718 = vmatpush1.bf16.msra.mxu0 0
    %719 = vmatprep.subr.bf16.mxu0 0
    %720 = vmatpush1.bf16.msra.mxu0 0
    %721 = vmatprep.subr.bf16.mxu0 0
    %722 = vmatpush1.bf16.msra.mxu0 0
    %723 = vmatprep.subr.bf16.mxu0 0
    %724 = vmatpush1.bf16.msra.mxu0 0
    %725 = vmatprep.mubr.bf16.mxu0 0
    %726 = vmatmul.mubr.bf16.gmra.mrb[0].mxu0 %v692
    %v727 = vpop.f32.mrb[0].mxu0
    %v728 = vadd.f32 0.0, %v727
    %v729 = vpop.f32.mrb[0].mxu0
    %v730 = vpop.f32.mrb[0].mxu0
    %v731 = vpop.f32.mrb[0].mxu0
    %732 = vdwg.mxu0
    %v733 = vadd.f32 %v691, %v728
    %v734 = vtanh.pop %v733
    %v735 = vld [vmem:[#allocation2 + $0x38] sm:$0xff]
    %v736 = vpack.c.bf16 %v690, %v690
    %737 = vmatprep.subr.bf16.mxu0 0
    %738 = vmatpush1.bf16.msra.mxu0 %v454
    %739 = vmatprep.subr.bf16.mxu0 0
    %740 = vmatpush1.bf16.msra.mxu0 %v455
    %741 = vmatprep.subr.bf16.mxu0 0
    %742 = vmatpush1.bf16.msra.mxu0 %v456
    %743 = vmatprep.subr.bf16.mxu0 0
    %744 = vmatpush1.bf16.msra.mxu0 %v457
    %745 = vmatprep.subr.bf16.mxu0 0
    %746 = vmatpush1.bf16.msra.mxu0 %v458
    %747 = vmatprep.subr.bf16.mxu0 0
    %748 = vmatpush1.bf16.msra.mxu0 %v459
    %749 = vmatprep.subr.bf16.mxu0 0
    %750 = vmatpush1.bf16.msra.mxu0 %v460
    %751 = vmatprep.subr.bf16.mxu0 0
    %752 = vmatpush1.bf16.msra.mxu0 %v461
    %753 = vmatprep.subr.bf16.mxu0 0
    %754 = vmatpush1.bf16.msra.mxu0 0
    %755 = vmatprep.subr.bf16.mxu0 0
    %756 = vmatpush1.bf16.msra.mxu0 0
    %757 = vmatprep.subr.bf16.mxu0 0
    %758 = vmatpush1.bf16.msra.mxu0 0
    %759 = vmatprep.subr.bf16.mxu0 0
    %760 = vmatpush1.bf16.msra.mxu0 0
    %761 = vmatprep.subr.bf16.mxu0 0
    %762 = vmatpush1.bf16.msra.mxu0 0
    %763 = vmatprep.subr.bf16.mxu0 0
    %764 = vmatpush1.bf16.msra.mxu0 0
    %765 = vmatprep.subr.bf16.mxu0 0
    %766 = vmatpush1.bf16.msra.mxu0 0
    %767 = vmatprep.subr.bf16.mxu0 0
    %768 = vmatpush1.bf16.msra.mxu0 0
    %769 = vmatprep.mubr.bf16.mxu0 0
    %770 = vmatmul.mubr.bf16.gmra.mrb[0].mxu0 %v736
    %v771 = vpop.f32.mrb[0].mxu0
    %v772 = vadd.f32 0.0, %v771
    %v773 = vpop.f32.mrb[0].mxu0
    %v774 = vpop.f32.mrb[0].mxu0
    %v775 = vpop.f32.mrb[0].mxu0
    %776 = vdwg.mxu0
    %v777 = vadd.f32 %v735, %v772
    %v778 = vtanh.pop %v777
    %v779 = vld [vmem:[#allocation2 + $0x40] sm:$0xff]
    %v780 = vpack.c.bf16 %v734, %v734
    %781 = vmatprep.subr.bf16.mxu0 0
    %782 = vmatpush1.bf16.msra.mxu0 %v454
    %783 = vmatprep.subr.bf16.mxu0 0
    %784 = vmatpush1.bf16.msra.mxu0 %v455
    %785 = vmatprep.subr.bf16.mxu0 0
    %786 = vmatpush1.bf16.msra.mxu0 %v456
    %787 = vmatprep.subr.bf16.mxu0 0
    %788 = vmatpush1.bf16.msra.mxu0 %v457
    %789 = vmatprep.subr.bf16.mxu0 0
    %790 = vmatpush1.bf16.msra.mxu0 %v458
    %791 = vmatprep.subr.bf16.mxu0 0
    %792 = vmatpush1.bf16.msra.mxu0 %v459
    %793 = vmatprep.subr.bf16.mxu0 0
    %794 = vmatpush1.bf16.msra.mxu0 %v460
    %795 = vmatprep.subr.bf16.mxu0 0
    %796 = vmatpush1.bf16.msra.mxu0 %v461
    %797 = vmatprep.subr.bf16.mxu0 0
    %798 = vmatpush1.bf16.msra.mxu0 0
    %799 = vmatprep.subr.bf16.mxu0 0
    %800 = vmatpush1.bf16.msra.mxu0 0
    %801 = vmatprep.subr.bf16.mxu0 0
    %802 = vmatpush1.bf16.msra.mxu0 0
    %803 = vmatprep.subr.bf16.mxu0 0
    %804 = vmatpush1.bf16.msra.mxu0 0
    %805 = vmatprep.subr.bf16.mxu0 0
    %806 = vmatpush1.bf16.msra.mxu0 0
    %807 = vmatprep.subr.bf16.mxu0 0
    %808 = vmatpush1.bf16.msra.mxu0 0
    %809 = vmatprep.subr.bf16.mxu0 0
    %810 = vmatpush1.bf16.msra.mxu0 0
    %811 = vmatprep.subr.bf16.mxu0 0
    %812 = vmatpush1.bf16.msra.mxu0 0
    %813 = vmatprep.mubr.bf16.mxu0 0
    %814 = vmatmul.mubr.bf16.gmra.mrb[0].mxu0 %v780
    %v815 = vpop.f32.mrb[0].mxu0
    %v816 = vadd.f32 0.0, %v815
    %v817 = vpop.f32.mrb[0].mxu0
    %v818 = vpop.f32.mrb[0].mxu0
    %v819 = vpop.f32.mrb[0].mxu0
    %820 = vdwg.mxu0
    %v821 = vadd.f32 %v779, %v816
    %v822 = vtanh.pop %v821
    %v823 = vld [vmem:[#allocation2 + $0x48] sm:$0xff]
    %v824 = vpack.c.bf16 %v778, %v778
    %825 = vmatprep.subr.bf16.mxu0 0
    %826 = vmatpush1.bf16.msra.mxu0 %v454
    %827 = vmatprep.subr.bf16.mxu0 0
    %828 = vmatpush1.bf16.msra.mxu0 %v455
    %829 = vmatprep.subr.bf16.mxu0 0
    %830 = vmatpush1.bf16.msra.mxu0 %v456
    %831 = vmatprep.subr.bf16.mxu0 0
    %832 = vmatpush1.bf16.msra.mxu0 %v457
    %833 = vmatprep.subr.bf16.mxu0 0
    %834 = vmatpush1.bf16.msra.mxu0 %v458
    %835 = vmatprep.subr.bf16.mxu0 0
    %836 = vmatpush1.bf16.msra.mxu0 %v459
    %837 = vmatprep.subr.bf16.mxu0 0
    %838 = vmatpush1.bf16.msra.mxu0 %v460
    %839 = vmatprep.subr.bf16.mxu0 0
    %840 = vmatpush1.bf16.msra.mxu0 %v461
    %841 = vmatprep.subr.bf16.mxu0 0
    %842 = vmatpush1.bf16.msra.mxu0 0
    %843 = vmatprep.subr.bf16.mxu0 0
    %844 = vmatpush1.bf16.msra.mxu0 0
    %845 = vmatprep.subr.bf16.mxu0 0
    %846 = vmatpush1.bf16.msra.mxu0 0
    %847 = vmatprep.subr.bf16.mxu0 0
    %848 = vmatpush1.bf16.msra.mxu0 0
    %849 = vmatprep.subr.bf16.mxu0 0
    %850 = vmatpush1.bf16.msra.mxu0 0
    %851 = vmatprep.subr.bf16.mxu0 0
    %852 = vmatpush1.bf16.msra.mxu0 0
    %853 = vmatprep.subr.bf16.mxu0 0
    %854 = vmatpush1.bf16.msra.mxu0 0
    %855 = vmatprep.subr.bf16.mxu0 0
    %856 = vmatpush1.bf16.msra.mxu0 0
    %857 = vmatprep.mubr.bf16.mxu0 0
    %858 = vmatmul.mubr.bf16.gmra.mrb[0].mxu0 %v824
    %v859 = vpop.f32.mrb[0].mxu0
    %v860 = vadd.f32 0.0, %v859
    %v861 = vpop.f32.mrb[0].mxu0
    %v862 = vpop.f32.mrb[0].mxu0
    %v863 = vpop.f32.mrb[0].mxu0
    %864 = vdwg.mxu0
    %v865 = vadd.f32 %v823, %v860
    %v866 = vtanh.pop %v865
    %v867 = vld [vmem:[#allocation2 + $0x50] sm:$0xff]
    %v868 = vpack.c.bf16 %v822, %v822
    %869 = vmatprep.subr.bf16.mxu0 0
    %870 = vmatpush1.bf16.msra.mxu0 %v454
    %871 = vmatprep.subr.bf16.mxu0 0
    %872 = vmatpush1.bf16.msra.mxu0 %v455
    %873 = vmatprep.subr.bf16.mxu0 0
    %874 = vmatpush1.bf16.msra.mxu0 %v456
    %875 = vmatprep.subr.bf16.mxu0 0
    %876 = vmatpush1.bf16.msra.mxu0 %v457
    %877 = vmatprep.subr.bf16.mxu0 0
    %878 = vmatpush1.bf16.msra.mxu0 %v458
    %879 = vmatprep.subr.bf16.mxu0 0
    %880 = vmatpush1.bf16.msra.mxu0 %v459
    %881 = vmatprep.subr.bf16.mxu0 0
    %882 = vmatpush1.bf16.msra.mxu0 %v460
    %883 = vmatprep.subr.bf16.mxu0 0
    %884 = vmatpush1.bf16.msra.mxu0 %v461
    %885 = vmatprep.subr.bf16.mxu0 0
    %886 = vmatpush1.bf16.msra.mxu0 0
    %887 = vmatprep.subr.bf16.mxu0 0
    %888 = vmatpush1.bf16.msra.mxu0 0
    %889 = vmatprep.subr.bf16.mxu0 0
    %890 = vmatpush1.bf16.msra.mxu0 0
    %891 = vmatprep.subr.bf16.mxu0 0
    %892 = vmatpush1.bf16.msra.mxu0 0
    %893 = vmatprep.subr.bf16.mxu0 0
    %894 = vmatpush1.bf16.msra.mxu0 0
    %895 = vmatprep.subr.bf16.mxu0 0
    %896 = vmatpush1.bf16.msra.mxu0 0
    %897 = vmatprep.subr.bf16.mxu0 0
    %898 = vmatpush1.bf16.msra.mxu0 0
    %899 = vmatprep.subr.bf16.mxu0 0
    %900 = vmatpush1.bf16.msra.mxu0 0
    %901 = vmatprep.mubr.bf16.mxu0 0
    %902 = vmatmul.mubr.bf16.gmra.mrb[0].mxu0 %v868
    %v903 = vpop.f32.mrb[0].mxu0
    %v904 = vadd.f32 0.0, %v903
    %v905 = vpop.f32.mrb[0].mxu0
    %v906 = vpop.f32.mrb[0].mxu0
    %v907 = vpop.f32.mrb[0].mxu0
    %908 = vdwg.mxu0
    %v909 = vadd.f32 %v867, %v904
    %v910 = vtanh.pop %v909
    %v911 = vld [vmem:[#allocation2 + $0x58] sm:$0xff]
    %v912 = vpack.c.bf16 %v866, %v866
    %913 = vmatprep.subr.bf16.mxu0 0
    %914 = vmatpush1.bf16.msra.mxu0 %v454
    %915 = vmatprep.subr.bf16.mxu0 0
    %916 = vmatpush1.bf16.msra.mxu0 %v455
    %917 = vmatprep.subr.bf16.mxu0 0
    %918 = vmatpush1.bf16.msra.mxu0 %v456
    %919 = vmatprep.subr.bf16.mxu0 0
    %920 = vmatpush1.bf16.msra.mxu0 %v457
    %921 = vmatprep.subr.bf16.mxu0 0
    %922 = vmatpush1.bf16.msra.mxu0 %v458
    %923 = vmatprep.subr.bf16.mxu0 0
    %924 = vmatpush1.bf16.msra.mxu0 %v459
    %925 = vmatprep.subr.bf16.mxu0 0
    %926 = vmatpush1.bf16.msra.mxu0 %v460
    %927 = vmatprep.subr.bf16.mxu0 0
    %928 = vmatpush1.bf16.msra.mxu0 %v461
    %929 = vmatprep.subr.bf16.mxu0 0
    %930 = vmatpush1.bf16.msra.mxu0 0
    %931 = vmatprep.subr.bf16.mxu0 0
    %932 = vmatpush1.bf16.msra.mxu0 0
    %933 = vmatprep.subr.bf16.mxu0 0
    %934 = vmatpush1.bf16.msra.mxu0 0
    %935 = vmatprep.subr.bf16.mxu0 0
    %936 = vmatpush1.bf16.msra.mxu0 0
    %937 = vmatprep.subr.bf16.mxu0 0
    %938 = vmatpush1.bf16.msra.mxu0 0
    %939 = vmatprep.subr.bf16.mxu0 0
    %940 = vmatpush1.bf16.msra.mxu0 0
    %941 = vmatprep.subr.bf16.mxu0 0
    %942 = vmatpush1.bf16.msra.mxu0 0
    %943 = vmatprep.subr.bf16.mxu0 0
    %944 = vmatpush1.bf16.msra.mxu0 0
    %945 = vmatprep.mubr.bf16.mxu0 0
    %946 = vmatmul.mubr.bf16.gmra.mrb[0].mxu0 %v912
    %v947 = vpop.f32.mrb[0].mxu0
    %v948 = vadd.f32 0.0, %v947
    %v949 = vpop.f32.mrb[0].mxu0
    %v950 = vpop.f32.mrb[0].mxu0
    %v951 = vpop.f32.mrb[0].mxu0
    %952 = vdwg.mxu0
    %v953 = vadd.f32 %v911, %v948
    %v954 = vtanh.pop %v953
    %v955 = vld [vmem:[#allocation2 + $0x60] sm:$0xff]
    %v956 = vpack.c.bf16 %v910, %v910
    %957 = vmatprep.subr.bf16.mxu0 0
    %958 = vmatpush1.bf16.msra.mxu0 %v454
    %959 = vmatprep.subr.bf16.mxu0 0
    %960 = vmatpush1.bf16.msra.mxu0 %v455
    %961 = vmatprep.subr.bf16.mxu0 0
    %962 = vmatpush1.bf16.msra.mxu0 %v456
    %963 = vmatprep.subr.bf16.mxu0 0
    %964 = vmatpush1.bf16.msra.mxu0 %v457
    %965 = vmatprep.subr.bf16.mxu0 0
    %966 = vmatpush1.bf16.msra.mxu0 %v458
    %967 = vmatprep.subr.bf16.mxu0 0
    %968 = vmatpush1.bf16.msra.mxu0 %v459
    %969 = vmatprep.subr.bf16.mxu0 0
    %970 = vmatpush1.bf16.msra.mxu0 %v460
    %971 = vmatprep.subr.bf16.mxu0 0
    %972 = vmatpush1.bf16.msra.mxu0 %v461
    %973 = vmatprep.subr.bf16.mxu0 0
    %974 = vmatpush1.bf16.msra.mxu0 0
    %975 = vmatprep.subr.bf16.mxu0 0
    %976 = vmatpush1.bf16.msra.mxu0 0
    %977 = vmatprep.subr.bf16.mxu0 0
    %978 = vmatpush1.bf16.msra.mxu0 0
    %979 = vmatprep.subr.bf16.mxu0 0
    %980 = vmatpush1.bf16.msra.mxu0 0
    %981 = vmatprep.subr.bf16.mxu0 0
    %982 = vmatpush1.bf16.msra.mxu0 0
    %983 = vmatprep.subr.bf16.mxu0 0
    %984 = vmatpush1.bf16.msra.mxu0 0
    %985 = vmatprep.subr.bf16.mxu0 0
    %986 = vmatpush1.bf16.msra.mxu0 0
    %987 = vmatprep.subr.bf16.mxu0 0
    %988 = vmatpush1.bf16.msra.mxu0 0
    %989 = vmatprep.mubr.bf16.mxu0 0
    %990 = vmatmul.mubr.bf16.gmra.mrb[0].mxu0 %v956
    %v991 = vpop.f32.mrb[0].mxu0
    %v992 = vadd.f32 0.0, %v991
    %v993 = vpop.f32.mrb[0].mxu0
    %v994 = vpop.f32.mrb[0].mxu0
    %v995 = vpop.f32.mrb[0].mxu0
    %996 = vdwg.mxu0
    %v997 = vadd.f32 %v955, %v992
    %v998 = vtanh.pop %v997
    %v999 = vld [vmem:[#allocation2 + $0x68] sm:$0xff]
    %v1000 = vpack.c.bf16 %v954, %v954
    %1001 = vmatprep.subr.bf16.mxu0 0
    %1002 = vmatpush1.bf16.msra.mxu0 %v454
    %1003 = vmatprep.subr.bf16.mxu0 0
    %1004 = vmatpush1.bf16.msra.mxu0 %v455
    %1005 = vmatprep.subr.bf16.mxu0 0
    %1006 = vmatpush1.bf16.msra.mxu0 %v456
    %1007 = vmatprep.subr.bf16.mxu0 0
    %1008 = vmatpush1.bf16.msra.mxu0 %v457
    %1009 = vmatprep.subr.bf16.mxu0 0
    %1010 = vmatpush1.bf16.msra.mxu0 %v458
    %1011 = vmatprep.subr.bf16.mxu0 0
    %1012 = vmatpush1.bf16.msra.mxu0 %v459
    %1013 = vmatprep.subr.bf16.mxu0 0
    %1014 = vmatpush1.bf16.msra.mxu0 %v460
    %1015 = vmatprep.subr.bf16.mxu0 0
    %1016 = vmatpush1.bf16.msra.mxu0 %v461
    %1017 = vmatprep.subr.bf16.mxu0 0
    %1018 = vmatpush1.bf16.msra.mxu0 0
    %1019 = vmatprep.subr.bf16.mxu0 0
    %1020 = vmatpush1.bf16.msra.mxu0 0
    %1021 = vmatprep.subr.bf16.mxu0 0
    %1022 = vmatpush1.bf16.msra.mxu0 0
    %1023 = vmatprep.subr.bf16.mxu0 0
    %1024 = vmatpush1.bf16.msra.mxu0 0
    %1025 = vmatprep.subr.bf16.mxu0 0
    %1026 = vmatpush1.bf16.msra.mxu0 0
    %1027 = vmatprep.subr.bf16.mxu0 0
    %1028 = vmatpush1.bf16.msra.mxu0 0
    %1029 = vmatprep.subr.bf16.mxu0 0
    %1030 = vmatpush1.bf16.msra.mxu0 0
    %1031 = vmatprep.subr.bf16.mxu0 0
    %1032 = vmatpush1.bf16.msra.mxu0 0
    %1033 = vmatprep.mubr.bf16.mxu0 0
    %1034 = vmatmul.mubr.bf16.gmra.mrb[0].mxu0 %v1000
    %v1035 = vpop.f32.mrb[0].mxu0
    %v1036 = vadd.f32 0.0, %v1035
    %v1037 = vpop.f32.mrb[0].mxu0
    %v1038 = vpop.f32.mrb[0].mxu0
    %v1039 = vpop.f32.mrb[0].mxu0
    %1040 = vdwg.mxu0
    %v1041 = vadd.f32 %v999, %v1036
    %v1042 = vtanh.pop %v1041
    %v1043 = vld [vmem:[#allocation2 + $0x70] sm:$0xff]
    %v1044 = vpack.c.bf16 %v998, %v998
    %1045 = vmatprep.subr.bf16.mxu0 0
    %1046 = vmatpush1.bf16.msra.mxu0 %v454
    %1047 = vmatprep.subr.bf16.mxu0 0
    %1048 = vmatpush1.bf16.msra.mxu0 %v455
    %1049 = vmatprep.subr.bf16.mxu0 0
    %1050 = vmatpush1.bf16.msra.mxu0 %v456
    %1051 = vmatprep.subr.bf16.mxu0 0
    %1052 = vmatpush1.bf16.msra.mxu0 %v457
    %1053 = vmatprep.subr.bf16.mxu0 0
    %1054 = vmatpush1.bf16.msra.mxu0 %v458
    %1055 = vmatprep.subr.bf16.mxu0 0
    %1056 = vmatpush1.bf16.msra.mxu0 %v459
    %1057 = vmatprep.subr.bf16.mxu0 0
    %1058 = vmatpush1.bf16.msra.mxu0 %v460
    %1059 = vmatprep.subr.bf16.mxu0 0
    %1060 = vmatpush1.bf16.msra.mxu0 %v461
    %1061 = vmatprep.subr.bf16.mxu0 0
    %1062 = vmatpush1.bf16.msra.mxu0 0
    %1063 = vmatprep.subr.bf16.mxu0 0
    %1064 = vmatpush1.bf16.msra.mxu0 0
    %1065 = vmatprep.subr.bf16.mxu0 0
    %1066 = vmatpush1.bf16.msra.mxu0 0
    %1067 = vmatprep.subr.bf16.mxu0 0
    %1068 = vmatpush1.bf16.msra.mxu0 0
    %1069 = vmatprep.subr.bf16.mxu0 0
    %1070 = vmatpush1.bf16.msra.mxu0 0
    %1071 = vmatprep.subr.bf16.mxu0 0
    %1072 = vmatpush1.bf16.msra.mxu0 0
    %1073 = vmatprep.subr.bf16.mxu0 0
    %1074 = vmatpush1.bf16.msra.mxu0 0
    %1075 = vmatprep.subr.bf16.mxu0 0
    %1076 = vmatpush1.bf16.msra.mxu0 0
    %1077 = vmatprep.mubr.bf16.mxu0 0
    %1078 = vmatmul.mubr.bf16.gmra.mrb[0].mxu0 %v1044
    %v1079 = vpop.f32.mrb[0].mxu0
    %v1080 = vadd.f32 0.0, %v1079
    %v1081 = vpop.f32.mrb[0].mxu0
    %v1082 = vpop.f32.mrb[0].mxu0
    %v1083 = vpop.f32.mrb[0].mxu0
    %1084 = vdwg.mxu0
    %v1085 = vadd.f32 %v1043, %v1080
    %v1086 = vtanh.pop %v1085
    %v1087 = vld [vmem:[#allocation2 + $0x78] sm:$0xff]
    %v1088 = vpack.c.bf16 %v1042, %v1042
    %1089 = vmatprep.subr.bf16.mxu0 0
    %1090 = vmatpush1.bf16.msra.mxu0 %v454
    %1091 = vmatprep.subr.bf16.mxu0 0
    %1092 = vmatpush1.bf16.msra.mxu0 %v455
    %1093 = vmatprep.subr.bf16.mxu0 0
    %1094 = vmatpush1.bf16.msra.mxu0 %v456
    %1095 = vmatprep.subr.bf16.mxu0 0
    %1096 = vmatpush1.bf16.msra.mxu0 %v457
    %1097 = vmatprep.subr.bf16.mxu0 0
    %1098 = vmatpush1.bf16.msra.mxu0 %v458
    %1099 = vmatprep.subr.bf16.mxu0 0
    %1100 = vmatpush1.bf16.msra.mxu0 %v459
    %1101 = vmatprep.subr.bf16.mxu0 0
    %1102 = vmatpush1.bf16.msra.mxu0 %v460
    %1103 = vmatprep.subr.bf16.mxu0 0
    %1104 = vmatpush1.bf16.msra.mxu0 %v461
    %1105 = vmatprep.subr.bf16.mxu0 0
    %1106 = vmatpush1.bf16.msra.mxu0 0
    %1107 = vmatprep.subr.bf16.mxu0 0
    %1108 = vmatpush1.bf16.msra.mxu0 0
    %1109 = vmatprep.subr.bf16.mxu0 0
    %1110 = vmatpush1.bf16.msra.mxu0 0
    %1111 = vmatprep.subr.bf16.mxu0 0
    %1112 = vmatpush1.bf16.msra.mxu0 0
    %1113 = vmatprep.subr.bf16.mxu0 0
    %1114 = vmatpush1.bf16.msra.mxu0 0
    %1115 = vmatprep.subr.bf16.mxu0 0
    %1116 = vmatpush1.bf16.msra.mxu0 0
    %1117 = vmatprep.subr.bf16.mxu0 0
    %1118 = vmatpush1.bf16.msra.mxu0 0
    %1119 = vmatprep.subr.bf16.mxu0 0
    %1120 = vmatpush1.bf16.msra.mxu0 0
    %1121 = vmatprep.mubr.bf16.mxu0 0
    %1122 = vmatmul.mubr.bf16.gmra.mrb[0].mxu0 %v1088
    %v1123 = vpop.f32.mrb[0].mxu0
    %v1124 = vadd.f32 0.0, %v1123
    %v1125 = vpop.f32.mrb[0].mxu0
    %v1126 = vpop.f32.mrb[0].mxu0
    %v1127 = vpop.f32.mrb[0].mxu0
    %1128 = vdwg.mxu0
    %v1129 = vadd.f32 %v1087, %v1124
    %v1130 = vtanh.pop %v1129
    %v1131 = vld [vmem:[%s6] sm:$0x1]
    %v1132 = vld [vmem:[%s8] sm:$0x1]
    %v1133 = vpack.c.bf16 %v403, %v403
    %v1134 = vpack.c.bf16 %v1086, %v1086
    %v1135 = vld [vmem:[#allocation9] sm:$0xf]
    %v1136 = vld [vmem:[#allocation9 + $0x4] sm:$0xf]
    %v1137 = vld [vmem:[#allocation9 + $0x8] sm:$0xf]
    %v1138 = vld [vmem:[#allocation9 + $0xc] sm:$0xf]
    %v1139 = vld [vmem:[#allocation9 + $0x10] sm:$0xf]
    %v1140 = vld [vmem:[#allocation9 + $0x14] sm:$0xf]
    %v1141 = vld [vmem:[#allocation9 + $0x18] sm:$0xf]
    %v1142 = vld [vmem:[#allocation9 + $0x1c] sm:$0xf]
    %v1143 = vld [vmem:[#allocation9 + $0x20] sm:$0xf]
    %v1144 = vld [vmem:[#allocation9 + $0x24] sm:$0xf]
    %v1145 = vld [vmem:[#allocation9 + $0x28] sm:$0xf]
    %v1146 = vld [vmem:[#allocation9 + $0x2c] sm:$0xf]
    %v1147 = vld [vmem:[#allocation9 + $0x30] sm:$0xf]
    %v1148 = vld [vmem:[#allocation9 + $0x34] sm:$0xf]
    %v1149 = vld [vmem:[#allocation9 + $0x38] sm:$0xf]
    %v1150 = vld [vmem:[#allocation9 + $0x3c] sm:$0xf]
    %v1151 = vld [vmem:[#allocation11] sm:$0xf]
    %v1152 = vld [vmem:[#allocation11 + $0x4] sm:$0xf]
    %v1153 = vld [vmem:[#allocation11 + $0x8] sm:$0xf]
    %v1154 = vld [vmem:[#allocation11 + $0xc] sm:$0xf]
    %v1155 = vld [vmem:[#allocation11 + $0x10] sm:$0xf]
    %v1156 = vld [vmem:[#allocation11 + $0x14] sm:$0xf]
    %v1157 = vld [vmem:[#allocation11 + $0x18] sm:$0xf]
    %v1158 = vld [vmem:[#allocation11 + $0x1c] sm:$0xf]
    %v1159 = vld [vmem:[#allocation11 + $0x20] sm:$0xf]
    %v1160 = vld [vmem:[#allocation11 + $0x24] sm:$0xf]
    %v1161 = vld [vmem:[#allocation11 + $0x28] sm:$0xf]
    %v1162 = vld [vmem:[#allocation11 + $0x2c] sm:$0xf]
    %v1163 = vld [vmem:[#allocation11 + $0x30] sm:$0xf]
    %v1164 = vld [vmem:[#allocation11 + $0x34] sm:$0xf]
    %v1165 = vld [vmem:[#allocation11 + $0x38] sm:$0xf]
    %v1166 = vld [vmem:[#allocation11 + $0x3c] sm:$0xf]
    %v1183 = vunpack.c.l.b16 %v1151
    %v1184 = vunpack.c.l.b16 %v1152
    %v1185 = vunpack.c.l.b16 %v1153
    %v1186 = vunpack.c.l.b16 %v1154
    %v1187 = vunpack.c.l.b16 %v1155
    %v1188 = vunpack.c.l.b16 %v1156
    %v1189 = vunpack.c.l.b16 %v1157
    %v1190 = vunpack.c.l.b16 %v1158
    %v1191 = vunpack.c.l.b16 %v1159
    %v1192 = vunpack.c.l.b16 %v1160
    %v1193 = vunpack.c.l.b16 %v1161
    %v1194 = vunpack.c.l.b16 %v1162
    %v1195 = vunpack.c.l.b16 %v1163
    %v1196 = vunpack.c.l.b16 %v1164
    %v1197 = vunpack.c.l.b16 %v1165
    %v1198 = vunpack.c.l.b16 %v1166
    %v1199 = vpack.c.b16 %v1184, %v1183
    %v1200 = vpack.c.b16 %v1186, %v1185
    %v1201 = vpack.c.b16 %v1188, %v1187
    %v1202 = vpack.c.b16 %v1190, %v1189
    %v1203 = vpack.c.b16 %v1192, %v1191
    %v1204 = vpack.c.b16 %v1194, %v1193
    %v1205 = vpack.c.b16 %v1196, %v1195
    %v1206 = vpack.c.b16 %v1198, %v1197
    %1215 = vmatprep.subr.bf16.mxu0 0
    %1216 = vmatpush1.bf16.msra.mxu0 %v1199
    %1217 = vmatprep.subr.bf16.mxu0 0
    %1218 = vmatpush1.bf16.msra.mxu0 %v1200
    %1219 = vmatprep.subr.bf16.mxu0 0
    %1220 = vmatpush1.bf16.msra.mxu0 %v1201
    %1221 = vmatprep.subr.bf16.mxu0 0
    %1222 = vmatpush1.bf16.msra.mxu0 %v1202
    %1223 = vmatprep.subr.bf16.mxu0 0
    %1224 = vmatpush1.bf16.msra.mxu0 %v1203
    %1225 = vmatprep.subr.bf16.mxu0 0
    %1226 = vmatpush1.bf16.msra.mxu0 %v1204
    %1227 = vmatprep.subr.bf16.mxu0 0
    %1228 = vmatpush1.bf16.msra.mxu0 %v1205
    %1229 = vmatprep.subr.bf16.mxu0 0
    %1230 = vmatpush1.bf16.msra.mxu0 %v1206
    %1231 = vmatprep.subr.bf16.mxu0 0
    %1232 = vmatpush1.bf16.msra.mxu0 0
    %1233 = vmatprep.subr.bf16.mxu0 0
    %1234 = vmatpush1.bf16.msra.mxu0 0
    %1235 = vmatprep.subr.bf16.mxu0 0
    %1236 = vmatpush1.bf16.msra.mxu0 0
    %1237 = vmatprep.subr.bf16.mxu0 0
    %1238 = vmatpush1.bf16.msra.mxu0 0
    %1239 = vmatprep.subr.bf16.mxu0 0
    %1240 = vmatpush1.bf16.msra.mxu0 0
    %1241 = vmatprep.subr.bf16.mxu0 0
    %1242 = vmatpush1.bf16.msra.mxu0 0
    %1243 = vmatprep.subr.bf16.mxu0 0
    %1244 = vmatpush1.bf16.msra.mxu0 0
    %1245 = vmatprep.subr.bf16.mxu0 0
    %1246 = vmatpush1.bf16.msra.mxu0 0
    %1247 = vmatprep.mubr.bf16.mxu0 0
    %1248 = vmatmul.mubr.bf16.gmra.mrb[0].mxu0 %v1133
    %v1249 = vpop.f32.mrb[0].mxu0
    %v1250 = vadd.f32 0.0, %v1249
    %v1251 = vpop.f32.mrb[0].mxu0
    %v1252 = vpop.f32.mrb[0].mxu0
    %v1253 = vpop.f32.mrb[0].mxu0
    %1254 = vdwg.mxu0
    %v1271 = vunpack.c.l.b16 %v1135
    %v1272 = vunpack.c.l.b16 %v1136
    %v1273 = vunpack.c.l.b16 %v1137
    %v1274 = vunpack.c.l.b16 %v1138
    %v1275 = vunpack.c.l.b16 %v1139
    %v1276 = vunpack.c.l.b16 %v1140
    %v1277 = vunpack.c.l.b16 %v1141
    %v1278 = vunpack.c.l.b16 %v1142
    %v1279 = vunpack.c.l.b16 %v1143
    %v1280 = vunpack.c.l.b16 %v1144
    %v1281 = vunpack.c.l.b16 %v1145
    %v1282 = vunpack.c.l.b16 %v1146
    %v1283 = vunpack.c.l.b16 %v1147
    %v1284 = vunpack.c.l.b16 %v1148
    %v1285 = vunpack.c.l.b16 %v1149
    %v1286 = vunpack.c.l.b16 %v1150
    %v1287 = vpack.c.b16 %v1272, %v1271
    %v1288 = vpack.c.b16 %v1274, %v1273
    %v1289 = vpack.c.b16 %v1276, %v1275
    %v1290 = vpack.c.b16 %v1278, %v1277
    %v1291 = vpack.c.b16 %v1280, %v1279
    %v1292 = vpack.c.b16 %v1282, %v1281
    %v1293 = vpack.c.b16 %v1284, %v1283
    %v1294 = vpack.c.b16 %v1286, %v1285
    %1303 = vmatprep.subr.bf16.mxu0 0
    %1304 = vmatpush1.bf16.msra.mxu0 %v1287
    %1305 = vmatprep.subr.bf16.mxu0 0
    %1306 = vmatpush1.bf16.msra.mxu0 %v1288
    %1307 = vmatprep.subr.bf16.mxu0 0
    %1308 = vmatpush1.bf16.msra.mxu0 %v1289
    %1309 = vmatprep.subr.bf16.mxu0 0
    %1310 = vmatpush1.bf16.msra.mxu0 %v1290
    %1311 = vmatprep.subr.bf16.mxu0 0
    %1312 = vmatpush1.bf16.msra.mxu0 %v1291
    %1313 = vmatprep.subr.bf16.mxu0 0
    %1314 = vmatpush1.bf16.msra.mxu0 %v1292
    %1315 = vmatprep.subr.bf16.mxu0 0
    %1316 = vmatpush1.bf16.msra.mxu0 %v1293
    %1317 = vmatprep.subr.bf16.mxu0 0
    %1318 = vmatpush1.bf16.msra.mxu0 %v1294
    %1319 = vmatprep.subr.bf16.mxu0 0
    %1320 = vmatpush1.bf16.msra.mxu0 0
    %1321 = vmatprep.subr.bf16.mxu0 0
    %1322 = vmatpush1.bf16.msra.mxu0 0
    %1323 = vmatprep.subr.bf16.mxu0 0
    %1324 = vmatpush1.bf16.msra.mxu0 0
    %1325 = vmatprep.subr.bf16.mxu0 0
    %1326 = vmatpush1.bf16.msra.mxu0 0
    %1327 = vmatprep.subr.bf16.mxu0 0
    %1328 = vmatpush1.bf16.msra.mxu0 0
    %1329 = vmatprep.subr.bf16.mxu0 0
    %1330 = vmatpush1.bf16.msra.mxu0 0
    %1331 = vmatprep.subr.bf16.mxu0 0
    %1332 = vmatpush1.bf16.msra.mxu0 0
    %1333 = vmatprep.subr.bf16.mxu0 0
    %1334 = vmatpush1.bf16.msra.mxu0 0
    %1335 = vmatprep.mubr.bf16.mxu0 0
    %1336 = vmatmul.mubr.bf16.gmra.mrb[0].mxu0 %v1134
    %v1337 = vpop.f32.mrb[0].mxu0
    %v1338 = vadd.f32 %v1250, %v1337
    %v1339 = vpop.f32.mrb[0].mxu0
    %v1340 = vpop.f32.mrb[0].mxu0
    %v1341 = vpop.f32.mrb[0].mxu0
    %1342 = vdwg.mxu0
    %v1344 = vlaneseq
    %v1345 = vshrl.u32 %v1344, 7
    %v1346 = vsub.s32 0, %v1345
    %v1347 = vrot.slane %v1131, %v1346
    %v1349 = vadd.f32 %v1338, %v1347
    %v1350 = vtanh.pop %v1349
    %v1351 = vpack.c.bf16 %v1350, %v1350
    %v1352 = vld [vmem:[#allocation12] sm:$0xf]
    %v1353 = vld [vmem:[#allocation12 + $0x4] sm:$0xf]
    %v1354 = vld [vmem:[#allocation12 + $0x8] sm:$0xf]
    %v1355 = vld [vmem:[#allocation12 + $0xc] sm:$0xf]
    %v1356 = vld [vmem:[#allocation12 + $0x10] sm:$0xf]
    %v1357 = vld [vmem:[#allocation12 + $0x14] sm:$0xf]
    %v1358 = vld [vmem:[#allocation12 + $0x18] sm:$0xf]
    %v1359 = vld [vmem:[#allocation12 + $0x1c] sm:$0xf]
    %v1360 = vld [vmem:[#allocation12 + $0x20] sm:$0xf]
    %v1361 = vld [vmem:[#allocation12 + $0x24] sm:$0xf]
    %v1362 = vld [vmem:[#allocation12 + $0x28] sm:$0xf]
    %v1363 = vld [vmem:[#allocation12 + $0x2c] sm:$0xf]
    %v1364 = vld [vmem:[#allocation12 + $0x30] sm:$0xf]
    %v1365 = vld [vmem:[#allocation12 + $0x34] sm:$0xf]
    %v1366 = vld [vmem:[#allocation12 + $0x38] sm:$0xf]
    %v1367 = vld [vmem:[#allocation12 + $0x3c] sm:$0xf]
    %v1369 = vlaneseq
    %v1370 = vshrl.u32 %v1369, 7
    %v1371 = vsub.s32 0, %v1370
    %v1372 = vrot.slane %v1132, %v1371
    %v1390 = vunpack.c.l.b16 %v1352
    %v1391 = vunpack.c.l.b16 %v1353
    %v1392 = vunpack.c.l.b16 %v1354
    %v1393 = vunpack.c.l.b16 %v1355
    %v1394 = vunpack.c.l.b16 %v1356
    %v1395 = vunpack.c.l.b16 %v1357
    %v1396 = vunpack.c.l.b16 %v1358
    %v1397 = vunpack.c.l.b16 %v1359
    %v1398 = vunpack.c.l.b16 %v1360
    %v1399 = vunpack.c.l.b16 %v1361
    %v1400 = vunpack.c.l.b16 %v1362
    %v1401 = vunpack.c.l.b16 %v1363
    %v1402 = vunpack.c.l.b16 %v1364
    %v1403 = vunpack.c.l.b16 %v1365
    %v1404 = vunpack.c.l.b16 %v1366
    %v1405 = vunpack.c.l.b16 %v1367
    %v1406 = vpack.c.b16 %v1391, %v1390
    %v1407 = vpack.c.b16 %v1393, %v1392
    %v1408 = vpack.c.b16 %v1395, %v1394
    %v1409 = vpack.c.b16 %v1397, %v1396
    %v1410 = vpack.c.b16 %v1399, %v1398
    %v1411 = vpack.c.b16 %v1401, %v1400
    %v1412 = vpack.c.b16 %v1403, %v1402
    %v1413 = vpack.c.b16 %v1405, %v1404
    %1422 = vmatprep.subr.bf16.mxu0 0
    %1423 = vmatpush1.bf16.msra.mxu0 %v1406
    %1424 = vmatprep.subr.bf16.mxu0 0
    %1425 = vmatpush1.bf16.msra.mxu0 %v1407
    %1426 = vmatprep.subr.bf16.mxu0 0
    %1427 = vmatpush1.bf16.msra.mxu0 %v1408
    %1428 = vmatprep.subr.bf16.mxu0 0
    %1429 = vmatpush1.bf16.msra.mxu0 %v1409
    %1430 = vmatprep.subr.bf16.mxu0 0
    %1431 = vmatpush1.bf16.msra.mxu0 %v1410
    %1432 = vmatprep.subr.bf16.mxu0 0
    %1433 = vmatpush1.bf16.msra.mxu0 %v1411
    %1434 = vmatprep.subr.bf16.mxu0 0
    %1435 = vmatpush1.bf16.msra.mxu0 %v1412
    %1436 = vmatprep.subr.bf16.mxu0 0
    %1437 = vmatpush1.bf16.msra.mxu0 %v1413
    %1438 = vmatprep.subr.bf16.mxu0 0
    %1439 = vmatpush1.bf16.msra.mxu0 0
    %1440 = vmatprep.subr.bf16.mxu0 0
    %1441 = vmatpush1.bf16.msra.mxu0 0
    %1442 = vmatprep.subr.bf16.mxu0 0
    %1443 = vmatpush1.bf16.msra.mxu0 0
    %1444 = vmatprep.subr.bf16.mxu0 0
    %1445 = vmatpush1.bf16.msra.mxu0 0
    %1446 = vmatprep.subr.bf16.mxu0 0
    %1447 = vmatpush1.bf16.msra.mxu0 0
    %1448 = vmatprep.subr.bf16.mxu0 0
    %1449 = vmatpush1.bf16.msra.mxu0 0
    %1450 = vmatprep.subr.bf16.mxu0 0
    %1451 = vmatpush1.bf16.msra.mxu0 0
    %1452 = vmatprep.subr.bf16.mxu0 0
    %1453 = vmatpush1.bf16.msra.mxu0 0
    %1454 = vmatprep.mubr.bf16.mxu0 0
    %1455 = vmatmul.mubr.bf16.gmra.mrb[0].mxu0 %v1351
    %v1456 = vpop.f32.mrb[0].mxu0
    %v1457 = vadd.f32 %v1372, %v1456
    %v1458 = vpop.f32.mrb[0].mxu0
    %v1459 = vpop.f32.mrb[0].mxu0
    %v1460 = vpop.f32.mrb[0].mxu0
    %1461 = vdwg.mxu0
    %v1462 = vtanh.pop %v1457
    %1463 = vst [vmem:[#allocation14] sm:$0xff] %v1462
    %v1464 = vpack.c.bf16 %v404, %v404
    %v1465 = vpack.c.bf16 %v1130, %v1130
    %v1466 = vld [vmem:[#allocation9] sm:$0xf]
    %v1467 = vld [vmem:[#allocation9 + $0x4] sm:$0xf]
    %v1468 = vld [vmem:[#allocation9 + $0x8] sm:$0xf]
    %v1469 = vld [vmem:[#allocation9 + $0xc] sm:$0xf]
    %v1470 = vld [vmem:[#allocation9 + $0x10] sm:$0xf]
    %v1471 = vld [vmem:[#allocation9 + $0x14] sm:$0xf]
    %v1472 = vld [vmem:[#allocation9 + $0x18] sm:$0xf]
    %v1473 = vld [vmem:[#allocation9 + $0x1c] sm:$0xf]
    %v1474 = vld [vmem:[#allocation9 + $0x20] sm:$0xf]
    %v1475 = vld [vmem:[#allocation9 + $0x24] sm:$0xf]
    %v1476 = vld [vmem:[#allocation9 + $0x28] sm:$0xf]
    %v1477 = vld [vmem:[#allocation9 + $0x2c] sm:$0xf]
    %v1478 = vld [vmem:[#allocation9 + $0x30] sm:$0xf]
    %v1479 = vld [vmem:[#allocation9 + $0x34] sm:$0xf]
    %v1480 = vld [vmem:[#allocation9 + $0x38] sm:$0xf]
    %v1481 = vld [vmem:[#allocation9 + $0x3c] sm:$0xf]
    %v1482 = vld [vmem:[#allocation11] sm:$0xf]
    %v1483 = vld [vmem:[#allocation11 + $0x4] sm:$0xf]
    %v1484 = vld [vmem:[#allocation11 + $0x8] sm:$0xf]
    %v1485 = vld [vmem:[#allocation11 + $0xc] sm:$0xf]
    %v1486 = vld [vmem:[#allocation11 + $0x10] sm:$0xf]
    %v1487 = vld [vmem:[#allocation11 + $0x14] sm:$0xf]
    %v1488 = vld [vmem:[#allocation11 + $0x18] sm:$0xf]
    %v1489 = vld [vmem:[#allocation11 + $0x1c] sm:$0xf]
    %v1490 = vld [vmem:[#allocation11 + $0x20] sm:$0xf]
    %v1491 = vld [vmem:[#allocation11 + $0x24] sm:$0xf]
    %v1492 = vld [vmem:[#allocation11 + $0x28] sm:$0xf]
    %v1493 = vld [vmem:[#allocation11 + $0x2c] sm:$0xf]
    %v1494 = vld [vmem:[#allocation11 + $0x30] sm:$0xf]
    %v1495 = vld [vmem:[#allocation11 + $0x34] sm:$0xf]
    %v1496 = vld [vmem:[#allocation11 + $0x38] sm:$0xf]
    %v1497 = vld [vmem:[#allocation11 + $0x3c] sm:$0xf]
    %v1514 = vunpack.c.l.b16 %v1482
    %v1515 = vunpack.c.l.b16 %v1483
    %v1516 = vunpack.c.l.b16 %v1484
    %v1517 = vunpack.c.l.b16 %v1485
    %v1518 = vunpack.c.l.b16 %v1486
    %v1519 = vunpack.c.l.b16 %v1487
    %v1520 = vunpack.c.l.b16 %v1488
    %v1521 = vunpack.c.l.b16 %v1489
    %v1522 = vunpack.c.l.b16 %v1490
    %v1523 = vunpack.c.l.b16 %v1491
    %v1524 = vunpack.c.l.b16 %v1492
    %v1525 = vunpack.c.l.b16 %v1493
    %v1526 = vunpack.c.l.b16 %v1494
    %v1527 = vunpack.c.l.b16 %v1495
    %v1528 = vunpack.c.l.b16 %v1496
    %v1529 = vunpack.c.l.b16 %v1497
    %v1530 = vpack.c.b16 %v1515, %v1514
    %v1531 = vpack.c.b16 %v1517, %v1516
    %v1532 = vpack.c.b16 %v1519, %v1518
    %v1533 = vpack.c.b16 %v1521, %v1520
    %v1534 = vpack.c.b16 %v1523, %v1522
    %v1535 = vpack.c.b16 %v1525, %v1524
    %v1536 = vpack.c.b16 %v1527, %v1526
    %v1537 = vpack.c.b16 %v1529, %v1528
    %1546 = vmatprep.subr.bf16.mxu0 0
    %1547 = vmatpush1.bf16.msra.mxu0 %v1530
    %1548 = vmatprep.subr.bf16.mxu0 0
    %1549 = vmatpush1.bf16.msra.mxu0 %v1531
    %1550 = vmatprep.subr.bf16.mxu0 0
    %1551 = vmatpush1.bf16.msra.mxu0 %v1532
    %1552 = vmatprep.subr.bf16.mxu0 0
    %1553 = vmatpush1.bf16.msra.mxu0 %v1533
    %1554 = vmatprep.subr.bf16.mxu0 0
    %1555 = vmatpush1.bf16.msra.mxu0 %v1534
    %1556 = vmatprep.subr.bf16.mxu0 0
    %1557 = vmatpush1.bf16.msra.mxu0 %v1535
    %1558 = vmatprep.subr.bf16.mxu0 0
    %1559 = vmatpush1.bf16.msra.mxu0 %v1536
    %1560 = vmatprep.subr.bf16.mxu0 0
    %1561 = vmatpush1.bf16.msra.mxu0 %v1537
    %1562 = vmatprep.subr.bf16.mxu0 0
    %1563 = vmatpush1.bf16.msra.mxu0 0
    %1564 = vmatprep.subr.bf16.mxu0 0
    %1565 = vmatpush1.bf16.msra.mxu0 0
    %1566 = vmatprep.subr.bf16.mxu0 0
    %1567 = vmatpush1.bf16.msra.mxu0 0
    %1568 = vmatprep.subr.bf16.mxu0 0
    %1569 = vmatpush1.bf16.msra.mxu0 0
    %1570 = vmatprep.subr.bf16.mxu0 0
    %1571 = vmatpush1.bf16.msra.mxu0 0
    %1572 = vmatprep.subr.bf16.mxu0 0
    %1573 = vmatpush1.bf16.msra.mxu0 0
    %1574 = vmatprep.subr.bf16.mxu0 0
    %1575 = vmatpush1.bf16.msra.mxu0 0
    %1576 = vmatprep.subr.bf16.mxu0 0
    %1577 = vmatpush1.bf16.msra.mxu0 0
    %1578 = vmatprep.mubr.bf16.mxu0 0
    %1579 = vmatmul.mubr.bf16.gmra.mrb[0].mxu0 %v1464
    %v1580 = vpop.f32.mrb[0].mxu0
    %v1581 = vadd.f32 0.0, %v1580
    %v1582 = vpop.f32.mrb[0].mxu0
    %v1583 = vpop.f32.mrb[0].mxu0
    %v1584 = vpop.f32.mrb[0].mxu0
    %1585 = vdwg.mxu0
    %v1602 = vunpack.c.l.b16 %v1466
    %v1603 = vunpack.c.l.b16 %v1467
    %v1604 = vunpack.c.l.b16 %v1468
    %v1605 = vunpack.c.l.b16 %v1469
    %v1606 = vunpack.c.l.b16 %v1470
    %v1607 = vunpack.c.l.b16 %v1471
    %v1608 = vunpack.c.l.b16 %v1472
    %v1609 = vunpack.c.l.b16 %v1473
    %v1610 = vunpack.c.l.b16 %v1474
    %v1611 = vunpack.c.l.b16 %v1475
    %v1612 = vunpack.c.l.b16 %v1476
    %v1613 = vunpack.c.l.b16 %v1477
    %v1614 = vunpack.c.l.b16 %v1478
    %v1615 = vunpack.c.l.b16 %v1479
    %v1616 = vunpack.c.l.b16 %v1480
    %v1617 = vunpack.c.l.b16 %v1481
    %v1618 = vpack.c.b16 %v1603, %v1602
    %v1619 = vpack.c.b16 %v1605, %v1604
    %v1620 = vpack.c.b16 %v1607, %v1606
    %v1621 = vpack.c.b16 %v1609, %v1608
    %v1622 = vpack.c.b16 %v1611, %v1610
    %v1623 = vpack.c.b16 %v1613, %v1612
    %v1624 = vpack.c.b16 %v1615, %v1614
    %v1625 = vpack.c.b16 %v1617, %v1616
    %1634 = vmatprep.subr.bf16.mxu0 0
    %1635 = vmatpush1.bf16.msra.mxu0 %v1618
    %1636 = vmatprep.subr.bf16.mxu0 0
    %1637 = vmatpush1.bf16.msra.mxu0 %v1619
    %1638 = vmatprep.subr.bf16.mxu0 0
    %1639 = vmatpush1.bf16.msra.mxu0 %v1620
    %1640 = vmatprep.subr.bf16.mxu0 0
    %1641 = vmatpush1.bf16.msra.mxu0 %v1621
    %1642 = vmatprep.subr.bf16.mxu0 0
    %1643 = vmatpush1.bf16.msra.mxu0 %v1622
    %1644 = vmatprep.subr.bf16.mxu0 0
    %1645 = vmatpush1.bf16.msra.mxu0 %v1623
    %1646 = vmatprep.subr.bf16.mxu0 0
    %1647 = vmatpush1.bf16.msra.mxu0 %v1624
    %1648 = vmatprep.subr.bf16.mxu0 0
    %1649 = vmatpush1.bf16.msra.mxu0 %v1625
    %1650 = vmatprep.subr.bf16.mxu0 0
    %1651 = vmatpush1.bf16.msra.mxu0 0
    %1652 = vmatprep.subr.bf16.mxu0 0
    %1653 = vmatpush1.bf16.msra.mxu0 0
    %1654 = vmatprep.subr.bf16.mxu0 0
    %1655 = vmatpush1.bf16.msra.mxu0 0
    %1656 = vmatprep.subr.bf16.mxu0 0
    %1657 = vmatpush1.bf16.msra.mxu0 0
    %1658 = vmatprep.subr.bf16.mxu0 0
    %1659 = vmatpush1.bf16.msra.mxu0 0
    %1660 = vmatprep.subr.bf16.mxu0 0
    %1661 = vmatpush1.bf16.msra.mxu0 0
    %1662 = vmatprep.subr.bf16.mxu0 0
    %1663 = vmatpush1.bf16.msra.mxu0 0
    %1664 = vmatprep.subr.bf16.mxu0 0
    %1665 = vmatpush1.bf16.msra.mxu0 0
    %1666 = vmatprep.mubr.bf16.mxu0 0
    %1667 = vmatmul.mubr.bf16.gmra.mrb[0].mxu0 %v1465
    %v1668 = vpop.f32.mrb[0].mxu0
    %v1669 = vadd.f32 %v1581, %v1668
    %v1670 = vpop.f32.mrb[0].mxu0
    %v1671 = vpop.f32.mrb[0].mxu0
    %v1672 = vpop.f32.mrb[0].mxu0
    %1673 = vdwg.mxu0
    %v1674 = vadd.f32 %v1669, %v1347
    %v1675 = vtanh.pop %v1674
    %v1676 = vpack.c.bf16 %v1675, %v1675
    %v1677 = vld [vmem:[#allocation12] sm:$0xf]
    %v1678 = vld [vmem:[#allocation12 + $0x4] sm:$0xf]
    %v1679 = vld [vmem:[#allocation12 + $0x8] sm:$0xf]
    %v1680 = vld [vmem:[#allocation12 + $0xc] sm:$0xf]
    %v1681 = vld [vmem:[#allocation12 + $0x10] sm:$0xf]
    %v1682 = vld [vmem:[#allocation12 + $0x14] sm:$0xf]
    %v1683 = vld [vmem:[#allocation12 + $0x18] sm:$0xf]
    %v1684 = vld [vmem:[#allocation12 + $0x1c] sm:$0xf]
    %v1685 = vld [vmem:[#allocation12 + $0x20] sm:$0xf]
    %v1686 = vld [vmem:[#allocation12 + $0x24] sm:$0xf]
    %v1687 = vld [vmem:[#allocation12 + $0x28] sm:$0xf]
    %v1688 = vld [vmem:[#allocation12 + $0x2c] sm:$0xf]
    %v1689 = vld [vmem:[#allocation12 + $0x30] sm:$0xf]
    %v1690 = vld [vmem:[#allocation12 + $0x34] sm:$0xf]
    %v1691 = vld [vmem:[#allocation12 + $0x38] sm:$0xf]
    %v1692 = vld [vmem:[#allocation12 + $0x3c] sm:$0xf]
    %v1709 = vunpack.c.l.b16 %v1677
    %v1710 = vunpack.c.l.b16 %v1678
    %v1711 = vunpack.c.l.b16 %v1679
    %v1712 = vunpack.c.l.b16 %v1680
    %v1713 = vunpack.c.l.b16 %v1681
    %v1714 = vunpack.c.l.b16 %v1682
    %v1715 = vunpack.c.l.b16 %v1683
    %v1716 = vunpack.c.l.b16 %v1684
    %v1717 = vunpack.c.l.b16 %v1685
    %v1718 = vunpack.c.l.b16 %v1686
    %v1719 = vunpack.c.l.b16 %v1687
    %v1720 = vunpack.c.l.b16 %v1688
    %v1721 = vunpack.c.l.b16 %v1689
    %v1722 = vunpack.c.l.b16 %v1690
    %v1723 = vunpack.c.l.b16 %v1691
    %v1724 = vunpack.c.l.b16 %v1692
    %v1725 = vpack.c.b16 %v1710, %v1709
    %v1726 = vpack.c.b16 %v1712, %v1711
    %v1727 = vpack.c.b16 %v1714, %v1713
    %v1728 = vpack.c.b16 %v1716, %v1715
    %v1729 = vpack.c.b16 %v1718, %v1717
    %v1730 = vpack.c.b16 %v1720, %v1719
    %v1731 = vpack.c.b16 %v1722, %v1721
    %v1732 = vpack.c.b16 %v1724, %v1723
    %1741 = vmatprep.subr.bf16.mxu0 0
    %1742 = vmatpush1.bf16.msra.mxu0 %v1725
    %1743 = vmatprep.subr.bf16.mxu0 0
    %1744 = vmatpush1.bf16.msra.mxu0 %v1726
    %1745 = vmatprep.subr.bf16.mxu0 0
    %1746 = vmatpush1.bf16.msra.mxu0 %v1727
    %1747 = vmatprep.subr.bf16.mxu0 0
    %1748 = vmatpush1.bf16.msra.mxu0 %v1728
    %1749 = vmatprep.subr.bf16.mxu0 0
    %1750 = vmatpush1.bf16.msra.mxu0 %v1729
    %1751 = vmatprep.subr.bf16.mxu0 0
    %1752 = vmatpush1.bf16.msra.mxu0 %v1730
    %1753 = vmatprep.subr.bf16.mxu0 0
    %1754 = vmatpush1.bf16.msra.mxu0 %v1731
    %1755 = vmatprep.subr.bf16.mxu0 0
    %1756 = vmatpush1.bf16.msra.mxu0 %v1732
    %1757 = vmatprep.subr.bf16.mxu0 0
    %1758 = vmatpush1.bf16.msra.mxu0 0
    %1759 = vmatprep.subr.bf16.mxu0 0
    %1760 = vmatpush1.bf16.msra.mxu0 0
    %1761 = vmatprep.subr.bf16.mxu0 0
    %1762 = vmatpush1.bf16.msra.mxu0 0
    %1763 = vmatprep.subr.bf16.mxu0 0
    %1764 = vmatpush1.bf16.msra.mxu0 0
    %1765 = vmatprep.subr.bf16.mxu0 0
    %1766 = vmatpush1.bf16.msra.mxu0 0
    %1767 = vmatprep.subr.bf16.mxu0 0
    %1768 = vmatpush1.bf16.msra.mxu0 0
    %1769 = vmatprep.subr.bf16.mxu0 0
    %1770 = vmatpush1.bf16.msra.mxu0 0
    %1771 = vmatprep.subr.bf16.mxu0 0
    %1772 = vmatpush1.bf16.msra.mxu0 0
    %1773 = vmatprep.mubr.bf16.mxu0 0
    %1774 = vmatmul.mubr.bf16.gmra.mrb[0].mxu0 %v1676
    %v1775 = vpop.f32.mrb[0].mxu0
    %v1776 = vadd.f32 %v1372, %v1775
    %v1777 = vpop.f32.mrb[0].mxu0
    %v1778 = vpop.f32.mrb[0].mxu0
    %v1779 = vpop.f32.mrb[0].mxu0
    %1780 = vdwg.mxu0
    %v1781 = vtanh.pop %v1776
    %1782 = vst [vmem:[#allocation14 + $0x8] sm:$0xff] %v1781
    // Predicated region
    $region62: #{tpu_custom_call.1} parent=1 // pred_check
      _
    $region63: #{tpu_custom_call.1} parent=1 // pred_check_branch
      %1784 = sbr.rel (0) target = $region65
    $region64: #{tpu_custom_call.1} parent=1 // pred_region
      %s1786 = ssub.s32 256, 256
      %1787 = vsyncadd [#allocation5], %s1786
      %s1788 = sshll.u32 [#allocation14], 4
      %s1789 = int_to_ptr.vmem [resolvable:$true] %s1788
      %1794 = dma.vmem_to_hbm [thread:$0]  %s1789, 256, %s9, [#allocation5], 128, 128, 8
    $region65: #{tpu_custom_call.1} parent=1 // pred_fallthru
      _
    // Predicated region
    $region66: #{tpu_custom_call.1} parent=1 // pred_check
      _
    $region67: #{tpu_custom_call.1} parent=1 // pred_check_branch
      %1796 = sbr.rel (0) target = $region69
    $region68: #{tpu_custom_call.1} parent=1 // pred_region
      %1797 = dma.done [#allocation5], 256
    $region69: #{tpu_custom_call.1} parent=1 // pred_fallthru
      _
    %1798 = vsyncpa [#allocation4], 1
    %1799 = vsyncpa [#allocation7], 1
    %1800 = vsyncpa [#allocation10], 1
    %1801 = vsyncpa [#allocation13], 1
    %1802 = vsyncpa [#allocation5], 1

</llo_original>
